<compile_context>
chip_gen: v7x
topology: tpu7x:2x2x1
jax: 0.10.0
libtpu: 0.0.40
codegen_flags: <defaults>
</compile_context>

<pallas_src>
import functools

import numpy as np
import jax
import jax.numpy as jnp
from jax.experimental import pallas as pl
from jax.experimental.pallas import tpu as pltpu


def igcnet_kernel(x_ref, ea_ref, src_oh_ref, valid_ref,
                  w1a_ref, b1a_ref, w1b_ref, b1b_ref,
                  w2a_ref, b2a_ref, w2b_ref, b2b_ref,
                  out_ref, *, n_nodes, max_deg, n_rounds):
    x = x_ref[...]                                   # (N, 3)
    ea = ea_ref[...]                                 # (E_pad, 1)  slot-major, padded slots are 0
    src_oh = src_oh_ref[...].astype(jnp.float32)     # (E_pad, N)  bf16 0/1 one-hot of edge source
    valid = valid_ref[...]                           # (E_pad, 1)  1 for real edges, 0 for padding
    w1a, b1a = w1a_ref[...], b1a_ref[...]            # (4,32), (1,32)
    w1b, b1b = w1b_ref[...], b1b_ref[...]            # (32,32), (1,32)
    w2a, b2a = w2a_ref[...], b2a_ref[...]            # (35,16), (1,16)
    w2b, b2b = w2b_ref[...], b2b_ref[...]            # (16,1), (1,1)

    x01 = x[:, 0:2]                                  # (N, 2)  invariant across rounds
    comb = x[:, 2:3]                                 # (N, 1)  evolving state (3rd column of x)

    # ---- loop-invariant precomputation (hoisted out of the 3-round loop) ----
    # mlp1 layer-1 pre-activation, fixed part:
    #   src_oh @ (x[:, :2] @ w1a[:2]) + ea @ w1a[3:4] + b1a
    base1 = (jnp.dot(src_oh,
                     jnp.dot(x01, w1a[0:2, :], preferred_element_type=jnp.float32),
                     preferred_element_type=jnp.float32)
             + jnp.dot(ea, w1a[3:4, :], preferred_element_type=jnp.float32)
             + b1a)                                                          # (E_pad, 32)
    # mlp2 layer-1 pre-activation, fixed part:  x[:, :2] @ w2a[:2] + b2a
    base2 = jnp.dot(x01, w2a[0:2, :], preferred_element_type=jnp.float32) + b2a   # (N, 16)

    for _ in range(n_rounds):
        # ---- message: h1 = relu(base1 + gather(comb @ w1a[2:3])) ; msg = relu(h1 @ w1b + b1b) ----
        cw1 = jnp.dot(comb, w1a[2:3, :], preferred_element_type=jnp.float32)       # (N, 32)
        h1 = jnp.maximum(
            base1 + jnp.dot(src_oh, cw1, preferred_element_type=jnp.float32), 0.0)  # (E_pad, 32)
        msg = jnp.maximum(
            jnp.dot(h1, w1b, preferred_element_type=jnp.float32) + b1b, 0.0)        # (E_pad, 32)
        msg = msg * valid          # multiplicative mask: msg >= 0, padded slots -> 0 (the max identity)

        # ---- aggregate: running max over the max_deg incoming-edge slots (slot-major layout) ----
        aggr = msg[0:n_nodes, :]                                                     # (N, 32)
        for d in range(1, max_deg):
            aggr = jnp.maximum(aggr, msg[d * n_nodes:(d + 1) * n_nodes, :])

        # ---- update: comb = sigmoid(mlp2([x, aggr])) ----
        h2 = jnp.maximum(
            base2
            + jnp.dot(comb, w2a[2:3, :], preferred_element_type=jnp.float32)
            + jnp.dot(aggr, w2a[3:, :], preferred_element_type=jnp.float32), 0.0)    # (N, 16)
        comb = jax.nn.sigmoid(
            jnp.dot(h2, w2b, preferred_element_type=jnp.float32) + b2b)              # (N, 1)

    out_ref[...] = jnp.concatenate([x01, comb], axis=1)                              # (N, 3)


def _prepare_topology(edge_index, n_nodes):
    """Host-side: sort edges by target into a slot-major, max_deg-padded layout.

    Row r = d * N + n of the padded edge arrays holds node n's d-th incoming edge
    (or padding).  Returns (max_deg, ea_perm, src_oh[bf16], valid).
    """
    ei = np.asarray(edge_index)
    src, tgt = ei[0], ei[1]
    E = int(src.shape[0])
    deg = np.bincount(tgt, minlength=n_nodes) if E > 0 else np.zeros(n_nodes, np.int64)
    max_deg = max(int(deg.max()) if E > 0 else 0, 1)
    E_pad = max_deg * n_nodes

    ea_perm = np.zeros((E_pad,), dtype=np.int32)
    src_oh = np.zeros((E_pad, n_nodes), dtype=np.float32)
    valid = np.zeros((E_pad, 1), dtype=np.float32)
    slot = np.zeros((n_nodes,), dtype=np.int64)
    for e in range(E):
        n = int(tgt[e])
        d = int(slot[n]); slot[n] += 1
        r = d * n_nodes + n
        ea_perm[r] = e
        src_oh[r, int(src[e])] = 1.0
        valid[r, 0] = 1.0

    return (max_deg,
            jnp.asarray(ea_perm),
            jnp.asarray(src_oh, dtype=jnp.bfloat16),   # 0/1 exact in bf16; halves DMA/VMEM
            jnp.asarray(valid))


def igcnet_forward(x, edge_attr, edge_index, params):
    """x: (B, N, 3) f32, edge_attr: (B, E, 1) f32, edge_index: (2, E) int (shared topology)."""
    B, N, _ = x.shape
    max_deg, ea_perm, src_oh, valid = _prepare_topology(edge_index, N)
    E_pad = max_deg * N

    # Permute + pad per-graph edge attributes into the slot-major layout (outside the kernel).
    ea_pad = edge_attr[:, ea_perm, :] * valid[None, :, :]        # (B, E_pad, 1)

    weights = (params["w1a"], params["b1a"], params["w1b"], params["b1b"],
               params["w2a"], params["b2a"], params["w2b"], params["b2b"])

    kernel = functools.partial(igcnet_kernel, n_nodes=N, max_deg=max_deg, n_rounds=3)

    in_specs = [
        pl.BlockSpec((None, N, 3), lambda b: (b, 0, 0)),        # x      (per-graph)
        pl.BlockSpec((None, E_pad, 1), lambda b: (b, 0, 0)),    # ea_pad (per-graph)
        pl.BlockSpec((E_pad, N), lambda b: (0, 0)),             # src_oh (shared, bf16)
        pl.BlockSpec((E_pad, 1), lambda b: (0, 0)),             # valid  (shared)
    ] + [pl.BlockSpec(w.shape, lambda b: (0, 0)) for w in weights]

    return pl.pallas_call(
        kernel,
        out_shape=jax.ShapeDtypeStruct((B, N, 3), jnp.float32),
        grid=(B,),
        in_specs=in_specs,
        out_specs=pl.BlockSpec((None, N, 3), lambda b: (b, 0, 0)),
        compiler_params=pltpu.CompilerParams(
            dimension_semantics=("parallel",)),   # batch axis: shards across TCs on v7x
    )(x, ea_pad, src_oh, valid, *weights)


def igcnet_reference(x, edge_attr, edge_index, params):
    """Pure-JAX batched reference (original formulation) for correctness checking."""
    N = x.shape[-2]
    src, tgt = edge_index[0], edge_index[1]

    def conv(xg, eag):
        x_j = xg[src]                                                    # (E, 3)
        tmp = jnp.concatenate([x_j, eag], axis=1)                        # (E, 4)
        h1 = jax.nn.relu(tmp @ params["w1a"] + params["b1a"][0])
        msg = jax.nn.relu(h1 @ params["w1b"] + params["b1b"][0])         # (E, 32)
        aggr = jax.ops.segment_max(msg, tgt, num_segments=N)             # (N, 32)
        aggr = jnp.where(jnp.isfinite(aggr), aggr, 0.0)
        tmp2 = jnp.concatenate([xg, aggr], axis=1)                       # (N, 35)
        h2 = jax.nn.relu(tmp2 @ params["w2a"] + params["b2a"][0])
        comb = jax.nn.sigmoid(h2 @ params["w2b"] + params["b2b"][0])     # (N, 1)
        return jnp.concatenate([xg[:, :2], comb], axis=1)

    def single(xg, eag):
        for _ in range(3):
            xg = conv(xg, eag)
        return xg

    return jax.vmap(single)(x, edge_attr)


def init_params(key):
    """Deterministic PyTorch-Linear-like init (uniform +-1/sqrt(fan_in))."""
    def linear(key, fan_in, fan_out):
        kw, kb = jax.random.split(key)
        bound = 1.0 / jnp.sqrt(fan_in)
        w = jax.random.uniform(kw, (fan_in, fan_out), jnp.float32, -bound, bound)
        b = jax.random.uniform(kb, (1, fan_out), jnp.float32, -bound, bound)
        return w, b

    k1, k2, k3, k4 = jax.random.split(key, 4)
    w1a, b1a = linear(k1, 4, 32)    # mlp1 layer 1
    w1b, b1b = linear(k2, 32, 32)   # mlp1 layer 2
    w2a, b2a = linear(k3, 35, 16)   # mlp2 layer 1
    w2b, b2b = linear(k4, 16, 1)    # mlp2 output (sigmoid)
    return dict(w1a=w1a, b1a=b1a, w1b=w1b, b1b=b1b,
                w2a=w2a, b2a=b2a, w2b=w2b, b2b=b2b)


if __name__ == "__main__":
    key = jax.random.PRNGKey(0)
    k_params, k_x, k_ea = jax.random.split(key, 3)

    # Batch of small fully-connected directed graphs (no self loops), like the K-user
    # interference-channel setup IGCNet targets. Topology is shared across the batch.
    B, N = 4, 8
    ii, jj = jnp.meshgrid(jnp.arange(N), jnp.arange(N), indexing="ij")
    mask = ii != jj
    src = ii[mask].astype(jnp.int32)
    tgt = jj[mask].astype(jnp.int32)
    edge_index = jnp.stack([src, tgt], axis=0)          # (2, E), E = 56
    E = int(src.shape[0])

    x0 = jax.random.uniform(k_x, (B, N, 3), jnp.float32)           # node features
    edge_attr = jax.random.uniform(k_ea, (B, E, 1), jnp.float32)   # edge features

    params = init_params(k_params)

    out = jax.block_until_ready(igcnet_forward(x0, edge_attr, edge_index, params))
    ref = jax.block_until_ready(igcnet_reference(x0, edge_attr, edge_index, params))

    assert out.shape == (B, N, 3)
    assert jnp.allclose(out, ref, atol=1e-5, rtol=1e-5), (out, ref)

    print("KERNEL_OK")
</pallas_src>

<mosaic_0001>
module attributes {stable_mosaic.version = 11 : i64} {
  func.func @igcnet_kernel(%arg0: i32, %arg1: memref<1x8x3xf32, #tpu.memory_space<vmem>>, %arg2: memref<1x56x1xf32, #tpu.memory_space<vmem>>, %arg3: memref<56x8xbf16, #tpu.memory_space<vmem>>, %arg4: memref<56x1xf32, #tpu.memory_space<vmem>>, %arg5: memref<4x32xf32, #tpu.memory_space<vmem>>, %arg6: memref<1x32xf32, #tpu.memory_space<vmem>>, %arg7: memref<32x32xf32, #tpu.memory_space<vmem>>, %arg8: memref<1x32xf32, #tpu.memory_space<vmem>>, %arg9: memref<35x16xf32, #tpu.memory_space<vmem>>, %arg10: memref<1x16xf32, #tpu.memory_space<vmem>>, %arg11: memref<16x1xf32, #tpu.memory_space<vmem>>, %arg12: memref<1x1xf32, #tpu.memory_space<vmem>>, %arg13: memref<1x8x3xf32, #tpu.memory_space<vmem>>) attributes {dimension_semantics = [#tpu.dimension_semantics<parallel>], iteration_bounds = array<i64: 4>, scalar_prefetch = 0 : i64, scratch_operands = 0 : i64, tpu.core_type = #tpu.core_type<tc>, window_params = [{transform_indices = @transform_0, window_bounds = array<i64: 1, 8, 3>}, {transform_indices = @transform_1, window_bounds = array<i64: 1, 56, 1>}, {pipeline_mode = #tpu.pipeline_mode<synchronous>, transform_indices = @transform_2, window_bounds = array<i64: 56, 8>}, {pipeline_mode = #tpu.pipeline_mode<synchronous>, transform_indices = @transform_3, window_bounds = array<i64: 56, 1>}, {pipeline_mode = #tpu.pipeline_mode<synchronous>, transform_indices = @transform_4, window_bounds = array<i64: 4, 32>}, {pipeline_mode = #tpu.pipeline_mode<synchronous>, transform_indices = @transform_5, window_bounds = array<i64: 1, 32>}, {pipeline_mode = #tpu.pipeline_mode<synchronous>, transform_indices = @transform_6, window_bounds = array<i64: 32, 32>}, {pipeline_mode = #tpu.pipeline_mode<synchronous>, transform_indices = @transform_7, window_bounds = array<i64: 1, 32>}, {pipeline_mode = #tpu.pipeline_mode<synchronous>, transform_indices = @transform_8, window_bounds = array<i64: 35, 16>}, {pipeline_mode = #tpu.pipeline_mode<synchronous>, transform_indices = @transform_9, window_bounds = array<i64: 1, 16>}, {pipeline_mode = #tpu.pipeline_mode<synchronous>, transform_indices = @transform_10, window_bounds = array<i64: 16, 1>}, {pipeline_mode = #tpu.pipeline_mode<synchronous>, transform_indices = @transform_11, window_bounds = array<i64: 1, 1>}, {transform_indices = @transform_12, window_bounds = array<i64: 1, 8, 3>}]} {
    %c0 = arith.constant 0 : index
    %c0_0 = arith.constant 0 : index
    %c0_1 = arith.constant 0 : index
    %0 = vector.load %arg1[%c0, %c0_0, %c0_1] : memref<1x8x3xf32, #tpu.memory_space<vmem>>, vector<1x8x3xf32>
    %1 = vector.shape_cast %0 : vector<1x8x3xf32> to vector<8x3xf32>
    %c0_2 = arith.constant 0 : index
    %c0_3 = arith.constant 0 : index
    %c0_4 = arith.constant 0 : index
    %2 = vector.load %arg2[%c0_2, %c0_3, %c0_4] : memref<1x56x1xf32, #tpu.memory_space<vmem>>, vector<1x56x1xf32>
    %3 = vector.shape_cast %2 : vector<1x56x1xf32> to vector<56x1xf32>
    %c0_5 = arith.constant 0 : index
    %c0_6 = arith.constant 0 : index
    %4 = vector.load %arg3[%c0_5, %c0_6] : memref<56x8xbf16, #tpu.memory_space<vmem>>, vector<56x8xbf16>
    %5 = arith.extf %4 : vector<56x8xbf16> to vector<56x8xf32>
    %c0_7 = arith.constant 0 : index
    %c0_8 = arith.constant 0 : index
    %6 = vector.load %arg4[%c0_7, %c0_8] : memref<56x1xf32, #tpu.memory_space<vmem>>, vector<56x1xf32>
    %c0_9 = arith.constant 0 : index
    %c0_10 = arith.constant 0 : index
    %7 = vector.load %arg5[%c0_9, %c0_10] : memref<4x32xf32, #tpu.memory_space<vmem>>, vector<4x32xf32>
    %c0_11 = arith.constant 0 : index
    %c0_12 = arith.constant 0 : index
    %8 = vector.load %arg6[%c0_11, %c0_12] : memref<1x32xf32, #tpu.memory_space<vmem>>, vector<1x32xf32>
    %c0_13 = arith.constant 0 : index
    %c0_14 = arith.constant 0 : index
    %9 = vector.load %arg7[%c0_13, %c0_14] : memref<32x32xf32, #tpu.memory_space<vmem>>, vector<32x32xf32>
    %c0_15 = arith.constant 0 : index
    %c0_16 = arith.constant 0 : index
    %10 = vector.load %arg8[%c0_15, %c0_16] : memref<1x32xf32, #tpu.memory_space<vmem>>, vector<1x32xf32>
    %c0_17 = arith.constant 0 : index
    %c0_18 = arith.constant 0 : index
    %11 = vector.load %arg9[%c0_17, %c0_18] : memref<35x16xf32, #tpu.memory_space<vmem>>, vector<35x16xf32>
    %c0_19 = arith.constant 0 : index
    %c0_20 = arith.constant 0 : index
    %12 = vector.load %arg10[%c0_19, %c0_20] : memref<1x16xf32, #tpu.memory_space<vmem>>, vector<1x16xf32>
    %c0_21 = arith.constant 0 : index
    %c0_22 = arith.constant 0 : index
    %13 = vector.load %arg11[%c0_21, %c0_22] : memref<16x1xf32, #tpu.memory_space<vmem>>, vector<16x1xf32>
    %c0_23 = arith.constant 0 : index
    %c0_24 = arith.constant 0 : index
    %14 = vector.load %arg12[%c0_23, %c0_24] : memref<1x1xf32, #tpu.memory_space<vmem>>, vector<1x1xf32>
    %15 = vector.extract_strided_slice %1 {offsets = [0, 0], sizes = [8, 2], strides = [1, 1]} : vector<8x3xf32> to vector<8x2xf32>
    %16 = vector.extract_strided_slice %1 {offsets = [0, 2], sizes = [8, 1], strides = [1, 1]} : vector<8x3xf32> to vector<8x1xf32>
    %17 = vector.extract_strided_slice %7 {offsets = [0, 0], sizes = [2, 32], strides = [1, 1]} : vector<4x32xf32> to vector<2x32xf32>
    %cst = arith.constant dense<0.000000e+00> : vector<8x32xf32>
    %18 = tpu.matmul %15, %17, %cst {dimension_numbers = #tpu.dot_dimension_numbers<[1], [0], [0], [1], [0, 0, 1, 1], [], []>} : vector<8x2xf32>, vector<2x32xf32>, vector<8x32xf32> -> vector<8x32xf32>
    %cst_25 = arith.constant dense<0.000000e+00> : vector<56x32xf32>
    %19 = tpu.matmul %5, %18, %cst_25 {dimension_numbers = #tpu.dot_dimension_numbers<[1], [0], [0], [1], [0, 0, 1, 1], [], []>} : vector<56x8xf32>, vector<8x32xf32>, vector<56x32xf32> -> vector<56x32xf32>
    %20 = vector.extract_strided_slice %7 {offsets = [3, 0], sizes = [1, 32], strides = [1, 1]} : vector<4x32xf32> to vector<1x32xf32>
    %cst_26 = arith.constant dense<0.000000e+00> : vector<56x32xf32>
    %21 = tpu.matmul %3, %20, %cst_26 {dimension_numbers = #tpu.dot_dimension_numbers<[1], [0], [0], [1], [0, 0, 1, 1], [], []>} : vector<56x1xf32>, vector<1x32xf32>, vector<56x32xf32> -> vector<56x32xf32>
    %22 = arith.addf %19, %21 : vector<56x32xf32>
    %23 = vector.broadcast %8 : vector<1x32xf32> to vector<56x32xf32>
    %24 = arith.addf %22, %23 : vector<56x32xf32>
    %25 = vector.extract_strided_slice %11 {offsets = [0, 0], sizes = [2, 16], strides = [1, 1]} : vector<35x16xf32> to vector<2x16xf32>
    %cst_27 = arith.constant dense<0.000000e+00> : vector<8x16xf32>
    %26 = tpu.matmul %15, %25, %cst_27 {dimension_numbers = #tpu.dot_dimension_numbers<[1], [0], [0], [1], [0, 0, 1, 1], [], []>} : vector<8x2xf32>, vector<2x16xf32>, vector<8x16xf32> -> vector<8x16xf32>
    %27 = vector.broadcast %12 : vector<1x16xf32> to vector<8x16xf32>
    %28 = arith.addf %26, %27 : vector<8x16xf32>
    %29 = vector.extract_strided_slice %7 {offsets = [2, 0], sizes = [1, 32], strides = [1, 1]} : vector<4x32xf32> to vector<1x32xf32>
    %cst_28 = arith.constant dense<0.000000e+00> : vector<8x32xf32>
    %30 = tpu.matmul %16, %29, %cst_28 {dimension_numbers = #tpu.dot_dimension_numbers<[1], [0], [0], [1], [0, 0, 1, 1], [], []>} : vector<8x1xf32>, vector<1x32xf32>, vector<8x32xf32> -> vector<8x32xf32>
    %cst_29 = arith.constant dense<0.000000e+00> : vector<56x32xf32>
    %31 = tpu.matmul %5, %30, %cst_29 {dimension_numbers = #tpu.dot_dimension_numbers<[1], [0], [0], [1], [0, 0, 1, 1], [], []>} : vector<56x8xf32>, vector<8x32xf32>, vector<56x32xf32> -> vector<56x32xf32>
    %32 = arith.addf %24, %31 : vector<56x32xf32>
    %cst_30 = arith.constant 0.000000e+00 : f32
    %33 = vector.broadcast %cst_30 : f32 to vector<56x32xf32>
    %34 = arith.maximumf %32, %33 : vector<56x32xf32>
    %cst_31 = arith.constant dense<0.000000e+00> : vector<56x32xf32>
    %35 = tpu.matmul %34, %9, %cst_31 {dimension_numbers = #tpu.dot_dimension_numbers<[1], [0], [0], [1], [0, 0, 1, 1], [], []>} : vector<56x32xf32>, vector<32x32xf32>, vector<56x32xf32> -> vector<56x32xf32>
    %36 = vector.broadcast %10 : vector<1x32xf32> to vector<56x32xf32>
    %37 = arith.addf %35, %36 : vector<56x32xf32>
    %cst_32 = arith.constant 0.000000e+00 : f32
    %38 = vector.broadcast %cst_32 : f32 to vector<56x32xf32>
    %39 = arith.maximumf %37, %38 : vector<56x32xf32>
    %40 = vector.broadcast %6 : vector<56x1xf32> to vector<56x32xf32>
    %41 = arith.mulf %39, %40 : vector<56x32xf32>
    %42 = vector.extract_strided_slice %41 {offsets = [0, 0], sizes = [8, 32], strides = [1, 1]} : vector<56x32xf32> to vector<8x32xf32>
    %43 = vector.extract_strided_slice %41 {offsets = [8, 0], sizes = [8, 32], strides = [1, 1]} : vector<56x32xf32> to vector<8x32xf32>
    %44 = arith.maximumf %42, %43 : vector<8x32xf32>
    %45 = vector.extract_strided_slice %41 {offsets = [16, 0], sizes = [8, 32], strides = [1, 1]} : vector<56x32xf32> to vector<8x32xf32>
    %46 = arith.maximumf %44, %45 : vector<8x32xf32>
    %47 = vector.extract_strided_slice %41 {offsets = [24, 0], sizes = [8, 32], strides = [1, 1]} : vector<56x32xf32> to vector<8x32xf32>
    %48 = arith.maximumf %46, %47 : vector<8x32xf32>
    %49 = vector.extract_strided_slice %41 {offsets = [32, 0], sizes = [8, 32], strides = [1, 1]} : vector<56x32xf32> to vector<8x32xf32>
    %50 = arith.maximumf %48, %49 : vector<8x32xf32>
    %51 = vector.extract_strided_slice %41 {offsets = [40, 0], sizes = [8, 32], strides = [1, 1]} : vector<56x32xf32> to vector<8x32xf32>
    %52 = arith.maximumf %50, %51 : vector<8x32xf32>
    %53 = vector.extract_strided_slice %41 {offsets = [48, 0], sizes = [8, 32], strides = [1, 1]} : vector<56x32xf32> to vector<8x32xf32>
    %54 = arith.maximumf %52, %53 : vector<8x32xf32>
    %55 = vector.extract_strided_slice %11 {offsets = [2, 0], sizes = [1, 16], strides = [1, 1]} : vector<35x16xf32> to vector<1x16xf32>
    %cst_33 = arith.constant dense<0.000000e+00> : vector<8x16xf32>
    %56 = tpu.matmul %16, %55, %cst_33 {dimension_numbers = #tpu.dot_dimension_numbers<[1], [0], [0], [1], [0, 0, 1, 1], [], []>} : vector<8x1xf32>, vector<1x16xf32>, vector<8x16xf32> -> vector<8x16xf32>
    %57 = arith.addf %28, %56 : vector<8x16xf32>
    %58 = vector.extract_strided_slice %11 {offsets = [3, 0], sizes = [32, 16], strides = [1, 1]} : vector<35x16xf32> to vector<32x16xf32>
    %cst_34 = arith.constant dense<0.000000e+00> : vector<8x16xf32>
    %59 = tpu.matmul %54, %58, %cst_34 {dimension_numbers = #tpu.dot_dimension_numbers<[1], [0], [0], [1], [0, 0, 1, 1], [], []>} : vector<8x32xf32>, vector<32x16xf32>, vector<8x16xf32> -> vector<8x16xf32>
    %60 = arith.addf %57, %59 : vector<8x16xf32>
    %cst_35 = arith.constant 0.000000e+00 : f32
    %61 = vector.broadcast %cst_35 : f32 to vector<8x16xf32>
    %62 = arith.maximumf %60, %61 : vector<8x16xf32>
    %cst_36 = arith.constant dense<0.000000e+00> : vector<8x1xf32>
    %63 = tpu.matmul %62, %13, %cst_36 {dimension_numbers = #tpu.dot_dimension_numbers<[1], [0], [0], [1], [0, 0, 1, 1], [], []>} : vector<8x16xf32>, vector<16x1xf32>, vector<8x1xf32> -> vector<8x1xf32>
    %64 = vector.broadcast %14 : vector<1x1xf32> to vector<8x1xf32>
    %65 = arith.addf %63, %64 : vector<8x1xf32>
    %66 = arith.negf %65 : vector<8x1xf32>
    %67 = math.exp %66 : vector<8x1xf32>
    %cst_37 = arith.constant 1.000000e+00 : f32
    %68 = vector.broadcast %cst_37 : f32 to vector<8x1xf32>
    %69 = arith.addf %68, %67 : vector<8x1xf32>
    %70 = arith.divf %68, %69 : vector<8x1xf32>
    %71 = vector.extract_strided_slice %7 {offsets = [2, 0], sizes = [1, 32], strides = [1, 1]} : vector<4x32xf32> to vector<1x32xf32>
    %cst_38 = arith.constant dense<0.000000e+00> : vector<8x32xf32>
    %72 = tpu.matmul %70, %71, %cst_38 {dimension_numbers = #tpu.dot_dimension_numbers<[1], [0], [0], [1], [0, 0, 1, 1], [], []>} : vector<8x1xf32>, vector<1x32xf32>, vector<8x32xf32> -> vector<8x32xf32>
    %cst_39 = arith.constant dense<0.000000e+00> : vector<56x32xf32>
    %73 = tpu.matmul %5, %72, %cst_39 {dimension_numbers = #tpu.dot_dimension_numbers<[1], [0], [0], [1], [0, 0, 1, 1], [], []>} : vector<56x8xf32>, vector<8x32xf32>, vector<56x32xf32> -> vector<56x32xf32>
    %74 = arith.addf %24, %73 : vector<56x32xf32>
    %cst_40 = arith.constant 0.000000e+00 : f32
    %75 = vector.broadcast %cst_40 : f32 to vector<56x32xf32>
    %76 = arith.maximumf %74, %75 : vector<56x32xf32>
    %cst_41 = arith.constant dense<0.000000e+00> : vector<56x32xf32>
    %77 = tpu.matmul %76, %9, %cst_41 {dimension_numbers = #tpu.dot_dimension_numbers<[1], [0], [0], [1], [0, 0, 1, 1], [], []>} : vector<56x32xf32>, vector<32x32xf32>, vector<56x32xf32> -> vector<56x32xf32>
    %78 = vector.broadcast %10 : vector<1x32xf32> to vector<56x32xf32>
    %79 = arith.addf %77, %78 : vector<56x32xf32>
    %cst_42 = arith.constant 0.000000e+00 : f32
    %80 = vector.broadcast %cst_42 : f32 to vector<56x32xf32>
    %81 = arith.maximumf %79, %80 : vector<56x32xf32>
    %82 = vector.broadcast %6 : vector<56x1xf32> to vector<56x32xf32>
    %83 = arith.mulf %81, %82 : vector<56x32xf32>
    %84 = vector.extract_strided_slice %83 {offsets = [0, 0], sizes = [8, 32], strides = [1, 1]} : vector<56x32xf32> to vector<8x32xf32>
    %85 = vector.extract_strided_slice %83 {offsets = [8, 0], sizes = [8, 32], strides = [1, 1]} : vector<56x32xf32> to vector<8x32xf32>
    %86 = arith.maximumf %84, %85 : vector<8x32xf32>
    %87 = vector.extract_strided_slice %83 {offsets = [16, 0], sizes = [8, 32], strides = [1, 1]} : vector<56x32xf32> to vector<8x32xf32>
    %88 = arith.maximumf %86, %87 : vector<8x32xf32>
    %89 = vector.extract_strided_slice %83 {offsets = [24, 0], sizes = [8, 32], strides = [1, 1]} : vector<56x32xf32> to vector<8x32xf32>
    %90 = arith.maximumf %88, %89 : vector<8x32xf32>
    %91 = vector.extract_strided_slice %83 {offsets = [32, 0], sizes = [8, 32], strides = [1, 1]} : vector<56x32xf32> to vector<8x32xf32>
    %92 = arith.maximumf %90, %91 : vector<8x32xf32>
    %93 = vector.extract_strided_slice %83 {offsets = [40, 0], sizes = [8, 32], strides = [1, 1]} : vector<56x32xf32> to vector<8x32xf32>
    %94 = arith.maximumf %92, %93 : vector<8x32xf32>
    %95 = vector.extract_strided_slice %83 {offsets = [48, 0], sizes = [8, 32], strides = [1, 1]} : vector<56x32xf32> to vector<8x32xf32>
    %96 = arith.maximumf %94, %95 : vector<8x32xf32>
    %97 = vector.extract_strided_slice %11 {offsets = [2, 0], sizes = [1, 16], strides = [1, 1]} : vector<35x16xf32> to vector<1x16xf32>
    %cst_43 = arith.constant dense<0.000000e+00> : vector<8x16xf32>
    %98 = tpu.matmul %70, %97, %cst_43 {dimension_numbers = #tpu.dot_dimension_numbers<[1], [0], [0], [1], [0, 0, 1, 1], [], []>} : vector<8x1xf32>, vector<1x16xf32>, vector<8x16xf32> -> vector<8x16xf32>
    %99 = arith.addf %28, %98 : vector<8x16xf32>
    %100 = vector.extract_strided_slice %11 {offsets = [3, 0], sizes = [32, 16], strides = [1, 1]} : vector<35x16xf32> to vector<32x16xf32>
    %cst_44 = arith.constant dense<0.000000e+00> : vector<8x16xf32>
    %101 = tpu.matmul %96, %100, %cst_44 {dimension_numbers = #tpu.dot_dimension_numbers<[1], [0], [0], [1], [0, 0, 1, 1], [], []>} : vector<8x32xf32>, vector<32x16xf32>, vector<8x16xf32> -> vector<8x16xf32>
    %102 = arith.addf %99, %101 : vector<8x16xf32>
    %cst_45 = arith.constant 0.000000e+00 : f32
    %103 = vector.broadcast %cst_45 : f32 to vector<8x16xf32>
    %104 = arith.maximumf %102, %103 : vector<8x16xf32>
    %cst_46 = arith.constant dense<0.000000e+00> : vector<8x1xf32>
    %105 = tpu.matmul %104, %13, %cst_46 {dimension_numbers = #tpu.dot_dimension_numbers<[1], [0], [0], [1], [0, 0, 1, 1], [], []>} : vector<8x16xf32>, vector<16x1xf32>, vector<8x1xf32> -> vector<8x1xf32>
    %106 = vector.broadcast %14 : vector<1x1xf32> to vector<8x1xf32>
    %107 = arith.addf %105, %106 : vector<8x1xf32>
    %108 = arith.negf %107 : vector<8x1xf32>
    %109 = math.exp %108 : vector<8x1xf32>
    %cst_47 = arith.constant 1.000000e+00 : f32
    %110 = vector.broadcast %cst_47 : f32 to vector<8x1xf32>
    %111 = arith.addf %110, %109 : vector<8x1xf32>
    %112 = arith.divf %110, %111 : vector<8x1xf32>
    %113 = vector.extract_strided_slice %7 {offsets = [2, 0], sizes = [1, 32], strides = [1, 1]} : vector<4x32xf32> to vector<1x32xf32>
    %cst_48 = arith.constant dense<0.000000e+00> : vector<8x32xf32>
    %114 = tpu.matmul %112, %113, %cst_48 {dimension_numbers = #tpu.dot_dimension_numbers<[1], [0], [0], [1], [0, 0, 1, 1], [], []>} : vector<8x1xf32>, vector<1x32xf32>, vector<8x32xf32> -> vector<8x32xf32>
    %cst_49 = arith.constant dense<0.000000e+00> : vector<56x32xf32>
    %115 = tpu.matmul %5, %114, %cst_49 {dimension_numbers = #tpu.dot_dimension_numbers<[1], [0], [0], [1], [0, 0, 1, 1], [], []>} : vector<56x8xf32>, vector<8x32xf32>, vector<56x32xf32> -> vector<56x32xf32>
    %116 = arith.addf %24, %115 : vector<56x32xf32>
    %cst_50 = arith.constant 0.000000e+00 : f32
    %117 = vector.broadcast %cst_50 : f32 to vector<56x32xf32>
    %118 = arith.maximumf %116, %117 : vector<56x32xf32>
    %cst_51 = arith.constant dense<0.000000e+00> : vector<56x32xf32>
    %119 = tpu.matmul %118, %9, %cst_51 {dimension_numbers = #tpu.dot_dimension_numbers<[1], [0], [0], [1], [0, 0, 1, 1], [], []>} : vector<56x32xf32>, vector<32x32xf32>, vector<56x32xf32> -> vector<56x32xf32>
    %120 = vector.broadcast %10 : vector<1x32xf32> to vector<56x32xf32>
    %121 = arith.addf %119, %120 : vector<56x32xf32>
    %cst_52 = arith.constant 0.000000e+00 : f32
    %122 = vector.broadcast %cst_52 : f32 to vector<56x32xf32>
    %123 = arith.maximumf %121, %122 : vector<56x32xf32>
    %124 = vector.broadcast %6 : vector<56x1xf32> to vector<56x32xf32>
    %125 = arith.mulf %123, %124 : vector<56x32xf32>
    %126 = vector.extract_strided_slice %125 {offsets = [0, 0], sizes = [8, 32], strides = [1, 1]} : vector<56x32xf32> to vector<8x32xf32>
    %127 = vector.extract_strided_slice %125 {offsets = [8, 0], sizes = [8, 32], strides = [1, 1]} : vector<56x32xf32> to vector<8x32xf32>
    %128 = arith.maximumf %126, %127 : vector<8x32xf32>
    %129 = vector.extract_strided_slice %125 {offsets = [16, 0], sizes = [8, 32], strides = [1, 1]} : vector<56x32xf32> to vector<8x32xf32>
    %130 = arith.maximumf %128, %129 : vector<8x32xf32>
    %131 = vector.extract_strided_slice %125 {offsets = [24, 0], sizes = [8, 32], strides = [1, 1]} : vector<56x32xf32> to vector<8x32xf32>
    %132 = arith.maximumf %130, %131 : vector<8x32xf32>
    %133 = vector.extract_strided_slice %125 {offsets = [32, 0], sizes = [8, 32], strides = [1, 1]} : vector<56x32xf32> to vector<8x32xf32>
    %134 = arith.maximumf %132, %133 : vector<8x32xf32>
    %135 = vector.extract_strided_slice %125 {offsets = [40, 0], sizes = [8, 32], strides = [1, 1]} : vector<56x32xf32> to vector<8x32xf32>
    %136 = arith.maximumf %134, %135 : vector<8x32xf32>
    %137 = vector.extract_strided_slice %125 {offsets = [48, 0], sizes = [8, 32], strides = [1, 1]} : vector<56x32xf32> to vector<8x32xf32>
    %138 = arith.maximumf %136, %137 : vector<8x32xf32>
    %139 = vector.extract_strided_slice %11 {offsets = [2, 0], sizes = [1, 16], strides = [1, 1]} : vector<35x16xf32> to vector<1x16xf32>
    %cst_53 = arith.constant dense<0.000000e+00> : vector<8x16xf32>
    %140 = tpu.matmul %112, %139, %cst_53 {dimension_numbers = #tpu.dot_dimension_numbers<[1], [0], [0], [1], [0, 0, 1, 1], [], []>} : vector<8x1xf32>, vector<1x16xf32>, vector<8x16xf32> -> vector<8x16xf32>
    %141 = arith.addf %28, %140 : vector<8x16xf32>
    %142 = vector.extract_strided_slice %11 {offsets = [3, 0], sizes = [32, 16], strides = [1, 1]} : vector<35x16xf32> to vector<32x16xf32>
    %cst_54 = arith.constant dense<0.000000e+00> : vector<8x16xf32>
    %143 = tpu.matmul %138, %142, %cst_54 {dimension_numbers = #tpu.dot_dimension_numbers<[1], [0], [0], [1], [0, 0, 1, 1], [], []>} : vector<8x32xf32>, vector<32x16xf32>, vector<8x16xf32> -> vector<8x16xf32>
    %144 = arith.addf %141, %143 : vector<8x16xf32>
    %cst_55 = arith.constant 0.000000e+00 : f32
    %145 = vector.broadcast %cst_55 : f32 to vector<8x16xf32>
    %146 = arith.maximumf %144, %145 : vector<8x16xf32>
    %cst_56 = arith.constant dense<0.000000e+00> : vector<8x1xf32>
    %147 = tpu.matmul %146, %13, %cst_56 {dimension_numbers = #tpu.dot_dimension_numbers<[1], [0], [0], [1], [0, 0, 1, 1], [], []>} : vector<8x16xf32>, vector<16x1xf32>, vector<8x1xf32> -> vector<8x1xf32>
    %148 = vector.broadcast %14 : vector<1x1xf32> to vector<8x1xf32>
    %149 = arith.addf %147, %148 : vector<8x1xf32>
    %150 = arith.negf %149 : vector<8x1xf32>
    %151 = math.exp %150 : vector<8x1xf32>
    %cst_57 = arith.constant 1.000000e+00 : f32
    %152 = vector.broadcast %cst_57 : f32 to vector<8x1xf32>
    %153 = arith.addf %152, %151 : vector<8x1xf32>
    %154 = arith.divf %152, %153 : vector<8x1xf32>
    %155 = tpu.concatenate %15, %154 in 1 : vector<8x2xf32>, vector<8x1xf32> -> vector<8x3xf32>
    %c0_58 = arith.constant 0 : index
    %c0_59 = arith.constant 0 : index
    %c0_60 = arith.constant 0 : index
    %156 = vector.load %arg13[%c0_58, %c0_59, %c0_60] : memref<1x8x3xf32, #tpu.memory_space<vmem>>, vector<1x8x3xf32>
    %157 = vector.shape_cast %156 : vector<1x8x3xf32> to vector<8x3xf32>
    %158 = vector.shape_cast %155 : vector<8x3xf32> to vector<1x8x3xf32>
    tpu.vector_store %arg13[%c0_58, %c0_59, %c0_60], %158 {strides = array<i32>} : memref<1x8x3xf32, #tpu.memory_space<vmem>>, vector<1x8x3xf32>,
    return
  }
  func.func @transform_0(%arg0: i32) -> (i32, i32, i32) {
    %c0_i32 = arith.constant 0 : i32
    %c0_i32_0 = arith.constant 0 : i32
    %c0_i32_1 = arith.constant 0 : i32
    return %arg0, %c0_i32, %c0_i32_0 : i32, i32, i32
  }
  func.func @transform_1(%arg0: i32) -> (i32, i32, i32) {
    %c0_i32 = arith.constant 0 : i32
    %c0_i32_0 = arith.constant 0 : i32
    %c0_i32_1 = arith.constant 0 : i32
    return %arg0, %c0_i32, %c0_i32_0 : i32, i32, i32
  }
  func.func @transform_2(%arg0: i32) -> (i32, i32) {
    %c0_i32 = arith.constant 0 : i32
    %c0_i32_0 = arith.constant 0 : i32
    %c0_i32_1 = arith.constant 0 : i32
    return %c0_i32, %c0_i32_0 : i32, i32
  }
  func.func @transform_3(%arg0: i32) -> (i32, i32) {
    %c0_i32 = arith.constant 0 : i32
    %c0_i32_0 = arith.constant 0 : i32
    %c0_i32_1 = arith.constant 0 : i32
    return %c0_i32, %c0_i32_0 : i32, i32
  }
  func.func @transform_4(%arg0: i32) -> (i32, i32) {
    %c0_i32 = arith.constant 0 : i32
    %c0_i32_0 = arith.constant 0 : i32
    %c0_i32_1 = arith.constant 0 : i32
    return %c0_i32, %c0_i32_0 : i32, i32
  }
  func.func @transform_5(%arg0: i32) -> (i32, i32) {
    %c0_i32 = arith.constant 0 : i32
    %c0_i32_0 = arith.constant 0 : i32
    %c0_i32_1 = arith.constant 0 : i32
    return %c0_i32, %c0_i32_0 : i32, i32
  }
  func.func @transform_6(%arg0: i32) -> (i32, i32) {
    %c0_i32 = arith.constant 0 : i32
    %c0_i32_0 = arith.constant 0 : i32
    %c0_i32_1 = arith.constant 0 : i32
    return %c0_i32, %c0_i32_0 : i32, i32
  }
  func.func @transform_7(%arg0: i32) -> (i32, i32) {
    %c0_i32 = arith.constant 0 : i32
    %c0_i32_0 = arith.constant 0 : i32
    %c0_i32_1 = arith.constant 0 : i32
    return %c0_i32, %c0_i32_0 : i32, i32
  }
  func.func @transform_8(%arg0: i32) -> (i32, i32) {
    %c0_i32 = arith.constant 0 : i32
    %c0_i32_0 = arith.constant 0 : i32
    %c0_i32_1 = arith.constant 0 : i32
    return %c0_i32, %c0_i32_0 : i32, i32
  }
  func.func @transform_9(%arg0: i32) -> (i32, i32) {
    %c0_i32 = arith.constant 0 : i32
    %c0_i32_0 = arith.constant 0 : i32
    %c0_i32_1 = arith.constant 0 : i32
    return %c0_i32, %c0_i32_0 : i32, i32
  }
  func.func @transform_10(%arg0: i32) -> (i32, i32) {
    %c0_i32 = arith.constant 0 : i32
    %c0_i32_0 = arith.constant 0 : i32
    %c0_i32_1 = arith.constant 0 : i32
    return %c0_i32, %c0_i32_0 : i32, i32
  }
  func.func @transform_11(%arg0: i32) -> (i32, i32) {
    %c0_i32 = arith.constant 0 : i32
    %c0_i32_0 = arith.constant 0 : i32
    %c0_i32_1 = arith.constant 0 : i32
    return %c0_i32, %c0_i32_0 : i32, i32
  }
  func.func @transform_12(%arg0: i32) -> (i32, i32, i32) {
    %c0_i32 = arith.constant 0 : i32
    %c0_i32_0 = arith.constant 0 : i32
    %c0_i32_1 = arith.constant 0 : i32
    return %arg0, %c0_i32, %c0_i32_0 : i32, i32, i32
  }
}

</mosaic_0001>

<llo_original>
// kernel: tpu_custom_call.1
$region0: #{tpu_custom_call.1}
  #allocation0 [shape = 'u32[]', space=smem, size = 0x4, offset = 0x4, fixed_abs, tag = 'smem constant byte address 0x4 - core index']
  #allocation1 [shape = 'u32[144,128]{1,0:T(1,128)}', space=vmem, size = 0x12000, scoped, tag = 'internal scratch']
  #allocation2 [shape = 'f32[1,1]{1,0:T(1,128)S(1)}', space=vmem, size = 0x200, scoped, tag = 'scoped memory for tpu_custom_call.1']
  %s0 = inlined_call_operand.vmem [shape: f32[4,8,3], index: 0, kind: input, shape index: {}]
  %s1 = inlined_call_operand.vmem [shape: f32[4,56,1], index: 1, kind: input, shape index: {}]
  %s2 = inlined_call_operand.vmem [shape: bf16[56,8], index: 2, kind: input, shape index: {}]
  %s3 = inlined_call_operand.vmem [shape: f32[56,1], index: 3, kind: input, shape index: {}]
  %s4 = inlined_call_operand.vmem [shape: f32[4,32], index: 4, kind: input, shape index: {}]
  %s5 = inlined_call_operand.vmem [shape: f32[1,32], index: 5, kind: input, shape index: {}]
  %s6 = inlined_call_operand.vmem [shape: f32[32,32], index: 6, kind: input, shape index: {}]
  %s7 = inlined_call_operand.vmem [shape: f32[1,32], index: 7, kind: input, shape index: {}]
  %s8 = inlined_call_operand.vmem [shape: f32[35,16], index: 8, kind: input, shape index: {}]
  %s9 = inlined_call_operand.vmem [shape: f32[1,16], index: 9, kind: input, shape index: {}]
  %s10 = inlined_call_operand.vmem [shape: f32[16,1], index: 10, kind: input, shape index: {}]
  %s11 = inlined_call_operand.<no memory space> [shape: f32[1,1], index: 11, kind: input, shape index: {}]
  %s12 = inlined_call_operand.vmem [shape: f32[4,8,3], index: 12, kind: output, shape index: {}]
  %s13 = sld [smem:[#allocation0]]
  $region81: #{tpu_custom_call.1} parent=0
    _
  %s15 = ssub.s32 1, %s13
  %s16 = scalar_select 0, %s15, %s13
  %v17 = vstv %s11
  %18 = vst [vmem:[#allocation2] sm:$0x1] %v17
  loop: start=0, step=1, limit=6
  $region2: #{tpu_custom_call.1} parent=0 // loop_pre_header
    _
  $region3: #{tpu_custom_call.1} parent=0 // loop_header
    %s20 = sphi 0, %s24
    %p21 = scmp.ge.s32.totalorder %s20, 6
    %s30 = sphi 0, %s32
    %s33 = sphi 0, %s30
    %s34 = sphi 0, %s33
    %s50 = sphi 0, %s34
    %s56 = sphi 0, %s58
    %s59 = sphi 0, %s56
    %s60 = sphi 0, %s59
    %s76 = sphi 0, %s60
    %s80 = sphi 0, %s80
    %s82 = sphi 0, %s80
    %s83 = sphi 0, %s82
    %s97 = sphi 0, %s83
    %s101 = sphi 0, %s101
    %s103 = sphi 0, %s101
    %s104 = sphi 0, %s103
    %s118 = sphi 0, %s104
    %s122 = sphi 0, %s122
    %s124 = sphi 0, %s122
    %s125 = sphi 0, %s124
    %s139 = sphi 0, %s125
    %s143 = sphi 0, %s143
    %s145 = sphi 0, %s143
    %s146 = sphi 0, %s145
    %s160 = sphi 0, %s146
    %s164 = sphi 0, %s164
    %s166 = sphi 0, %s164
    %s167 = sphi 0, %s166
    %s181 = sphi 0, %s167
    %s185 = sphi 0, %s185
    %s187 = sphi 0, %s185
    %s188 = sphi 0, %s187
    %s202 = sphi 0, %s188
    %s206 = sphi 0, %s206
    %s208 = sphi 0, %s206
    %s209 = sphi 0, %s208
    %s223 = sphi 0, %s209
    %s227 = sphi 0, %s227
    %s229 = sphi 0, %s227
    %s230 = sphi 0, %s229
    %s244 = sphi 0, %s230
    %s248 = sphi 0, %s248
    %s250 = sphi 0, %s248
    %s251 = sphi 0, %s250
    %s265 = sphi 0, %s251
    %s269 = sphi 0, %s269
    %s271 = sphi 0, %s269
    %s272 = sphi 0, %s271
    %s286 = sphi 0, %s272
    %s292 = sphi 0, %s294
    %s295 = sphi 0, %s292
    %s296 = sphi 0, %s295
    %s312 = sphi 0, %s296
  $region4: #{tpu_custom_call.1} parent=0 // loop_header_branch
    %23 = sbr.rel (%p21) target = $region8
  $region5: #{tpu_custom_call.1} parent=0 // loop_body
    %s25 = ssub.s32 %s20, 1
    %s26 = ssub.s32 %s20, 2
    %s27 = sadd.s32 %s20, 1
    %s28 = ssub.s32 %s20, %s27
    %p29 = scmp.eq.s32.totalorder %s28, 0
    %s31 = sadd.s32 %s30, 1
    %s32 = scalar_select %p29, %s30, %s31
    %p35 = pneg %p29
    %p36 = scmp.eq.s32.totalorder %s20, 3
    %p37 = por %p35, %p36
    %p38 = scmp.ne.s32.totalorder %s30, %s33
    %p39 = scmp.eq.s32.totalorder %s20, 0
    %p40 = por %p38, %p39
    %p41 = scmp.ne.s32.totalorder %s30, %s33
    %p42 = scmp.eq.s32.totalorder %s25, 3
    %p43 = por %p41, %p42
    %p44 = scmp.ne.s32.totalorder %s33, %s34
    %p45 = scmp.eq.s32.totalorder %s25, 0
    %p46 = por %p44, %p45
    %p47 = scmp.ne.s32.totalorder %s33, %s34
    %p48 = scmp.eq.s32.totalorder %s26, 3
    %p49 = por %p47, %p48
    %p51 = scmp.ne.s32.totalorder %s34, %s50
    %p52 = scmp.eq.s32.totalorder %s26, 0
    %p53 = por %p51, %p52
    %s54 = ssub.s32 %s20, %s27
    %p55 = scmp.eq.s32.totalorder %s54, 0
    %s57 = sadd.s32 %s56, 1
    %s58 = scalar_select %p55, %s56, %s57
    %p61 = pneg %p55
    %p62 = scmp.eq.s32.totalorder %s20, 3
    %p63 = por %p61, %p62
    %p64 = scmp.ne.s32.totalorder %s56, %s59
    %p65 = scmp.eq.s32.totalorder %s20, 0
    %p66 = por %p64, %p65
    %p67 = scmp.ne.s32.totalorder %s56, %s59
    %p68 = scmp.eq.s32.totalorder %s25, 3
    %p69 = por %p67, %p68
    %p70 = scmp.ne.s32.totalorder %s59, %s60
    %p71 = scmp.eq.s32.totalorder %s25, 0
    %p72 = por %p70, %p71
    %p73 = scmp.ne.s32.totalorder %s59, %s60
    %p74 = scmp.eq.s32.totalorder %s26, 3
    %p75 = por %p73, %p74
    %p77 = scmp.ne.s32.totalorder %s60, %s76
    %p78 = scmp.eq.s32.totalorder %s26, 0
    %p79 = por %p77, %p78
    %s81 = sadd.s32 %s80, 1
    %p84 = scmp.eq.s32.totalorder %s20, 3
    %p85 = scmp.ne.s32.totalorder %s80, %s82
    %p86 = scmp.eq.s32.totalorder %s20, 0
    %p87 = por %p85, %p86
    %p88 = scmp.ne.s32.totalorder %s80, %s82
    %p89 = scmp.eq.s32.totalorder %s25, 3
    %p90 = por %p88, %p89
    %p91 = scmp.ne.s32.totalorder %s82, %s83
    %p92 = scmp.eq.s32.totalorder %s25, 0
    %p93 = por %p91, %p92
    %p94 = scmp.ne.s32.totalorder %s82, %s83
    %p95 = scmp.eq.s32.totalorder %s26, 3
    %p96 = por %p94, %p95
    %p98 = scmp.ne.s32.totalorder %s83, %s97
    %p99 = scmp.eq.s32.totalorder %s26, 0
    %p100 = por %p98, %p99
    %s102 = sadd.s32 %s101, 1
    %p105 = scmp.eq.s32.totalorder %s20, 3
    %p106 = scmp.ne.s32.totalorder %s101, %s103
    %p107 = scmp.eq.s32.totalorder %s20, 0
    %p108 = por %p106, %p107
    %p109 = scmp.ne.s32.totalorder %s101, %s103
    %p110 = scmp.eq.s32.totalorder %s25, 3
    %p111 = por %p109, %p110
    %p112 = scmp.ne.s32.totalorder %s103, %s104
    %p113 = scmp.eq.s32.totalorder %s25, 0
    %p114 = por %p112, %p113
    %p115 = scmp.ne.s32.totalorder %s103, %s104
    %p116 = scmp.eq.s32.totalorder %s26, 3
    %p117 = por %p115, %p116
    %p119 = scmp.ne.s32.totalorder %s104, %s118
    %p120 = scmp.eq.s32.totalorder %s26, 0
    %p121 = por %p119, %p120
    %s123 = sadd.s32 %s122, 1
    %p126 = scmp.eq.s32.totalorder %s20, 3
    %p127 = scmp.ne.s32.totalorder %s122, %s124
    %p128 = scmp.eq.s32.totalorder %s20, 0
    %p129 = por %p127, %p128
    %p130 = scmp.ne.s32.totalorder %s122, %s124
    %p131 = scmp.eq.s32.totalorder %s25, 3
    %p132 = por %p130, %p131
    %p133 = scmp.ne.s32.totalorder %s124, %s125
    %p134 = scmp.eq.s32.totalorder %s25, 0
    %p135 = por %p133, %p134
    %p136 = scmp.ne.s32.totalorder %s124, %s125
    %p137 = scmp.eq.s32.totalorder %s26, 3
    %p138 = por %p136, %p137
    %p140 = scmp.ne.s32.totalorder %s125, %s139
    %p141 = scmp.eq.s32.totalorder %s26, 0
    %p142 = por %p140, %p141
    %s144 = sadd.s32 %s143, 1
    %p147 = scmp.eq.s32.totalorder %s20, 3
    %p148 = scmp.ne.s32.totalorder %s143, %s145
    %p149 = scmp.eq.s32.totalorder %s20, 0
    %p150 = por %p148, %p149
    %p151 = scmp.ne.s32.totalorder %s143, %s145
    %p152 = scmp.eq.s32.totalorder %s25, 3
    %p153 = por %p151, %p152
    %p154 = scmp.ne.s32.totalorder %s145, %s146
    %p155 = scmp.eq.s32.totalorder %s25, 0
    %p156 = por %p154, %p155
    %p157 = scmp.ne.s32.totalorder %s145, %s146
    %p158 = scmp.eq.s32.totalorder %s26, 3
    %p159 = por %p157, %p158
    %p161 = scmp.ne.s32.totalorder %s146, %s160
    %p162 = scmp.eq.s32.totalorder %s26, 0
    %p163 = por %p161, %p162
    %s165 = sadd.s32 %s164, 1
    %p168 = scmp.eq.s32.totalorder %s20, 3
    %p169 = scmp.ne.s32.totalorder %s164, %s166
    %p170 = scmp.eq.s32.totalorder %s20, 0
    %p171 = por %p169, %p170
    %p172 = scmp.ne.s32.totalorder %s164, %s166
    %p173 = scmp.eq.s32.totalorder %s25, 3
    %p174 = por %p172, %p173
    %p175 = scmp.ne.s32.totalorder %s166, %s167
    %p176 = scmp.eq.s32.totalorder %s25, 0
    %p177 = por %p175, %p176
    %p178 = scmp.ne.s32.totalorder %s166, %s167
    %p179 = scmp.eq.s32.totalorder %s26, 3
    %p180 = por %p178, %p179
    %p182 = scmp.ne.s32.totalorder %s167, %s181
    %p183 = scmp.eq.s32.totalorder %s26, 0
    %p184 = por %p182, %p183
    %s186 = sadd.s32 %s185, 1
    %p189 = scmp.eq.s32.totalorder %s20, 3
    %p190 = scmp.ne.s32.totalorder %s185, %s187
    %p191 = scmp.eq.s32.totalorder %s20, 0
    %p192 = por %p190, %p191
    %p193 = scmp.ne.s32.totalorder %s185, %s187
    %p194 = scmp.eq.s32.totalorder %s25, 3
    %p195 = por %p193, %p194
    %p196 = scmp.ne.s32.totalorder %s187, %s188
    %p197 = scmp.eq.s32.totalorder %s25, 0
    %p198 = por %p196, %p197
    %p199 = scmp.ne.s32.totalorder %s187, %s188
    %p200 = scmp.eq.s32.totalorder %s26, 3
    %p201 = por %p199, %p200
    %p203 = scmp.ne.s32.totalorder %s188, %s202
    %p204 = scmp.eq.s32.totalorder %s26, 0
    %p205 = por %p203, %p204
    %s207 = sadd.s32 %s206, 1
    %p210 = scmp.eq.s32.totalorder %s20, 3
    %p211 = scmp.ne.s32.totalorder %s206, %s208
    %p212 = scmp.eq.s32.totalorder %s20, 0
    %p213 = por %p211, %p212
    %p214 = scmp.ne.s32.totalorder %s206, %s208
    %p215 = scmp.eq.s32.totalorder %s25, 3
    %p216 = por %p214, %p215
    %p217 = scmp.ne.s32.totalorder %s208, %s209
    %p218 = scmp.eq.s32.totalorder %s25, 0
    %p219 = por %p217, %p218
    %p220 = scmp.ne.s32.totalorder %s208, %s209
    %p221 = scmp.eq.s32.totalorder %s26, 3
    %p222 = por %p220, %p221
    %p224 = scmp.ne.s32.totalorder %s209, %s223
    %p225 = scmp.eq.s32.totalorder %s26, 0
    %p226 = por %p224, %p225
    %s228 = sadd.s32 %s227, 1
    %p231 = scmp.eq.s32.totalorder %s20, 3
    %p232 = scmp.ne.s32.totalorder %s227, %s229
    %p233 = scmp.eq.s32.totalorder %s20, 0
    %p234 = por %p232, %p233
    %p235 = scmp.ne.s32.totalorder %s227, %s229
    %p236 = scmp.eq.s32.totalorder %s25, 3
    %p237 = por %p235, %p236
    %p238 = scmp.ne.s32.totalorder %s229, %s230
    %p239 = scmp.eq.s32.totalorder %s25, 0
    %p240 = por %p238, %p239
    %p241 = scmp.ne.s32.totalorder %s229, %s230
    %p242 = scmp.eq.s32.totalorder %s26, 3
    %p243 = por %p241, %p242
    %p245 = scmp.ne.s32.totalorder %s230, %s244
    %p246 = scmp.eq.s32.totalorder %s26, 0
    %p247 = por %p245, %p246
    %s249 = sadd.s32 %s248, 1
    %p252 = scmp.eq.s32.totalorder %s20, 3
    %p253 = scmp.ne.s32.totalorder %s248, %s250
    %p254 = scmp.eq.s32.totalorder %s20, 0
    %p255 = por %p253, %p254
    %p256 = scmp.ne.s32.totalorder %s248, %s250
    %p257 = scmp.eq.s32.totalorder %s25, 3
    %p258 = por %p256, %p257
    %p259 = scmp.ne.s32.totalorder %s250, %s251
    %p260 = scmp.eq.s32.totalorder %s25, 0
    %p261 = por %p259, %p260
    %p262 = scmp.ne.s32.totalorder %s250, %s251
    %p263 = scmp.eq.s32.totalorder %s26, 3
    %p264 = por %p262, %p263
    %p266 = scmp.ne.s32.totalorder %s251, %s265
    %p267 = scmp.eq.s32.totalorder %s26, 0
    %p268 = por %p266, %p267
    %s270 = sadd.s32 %s269, 1
    %p273 = scmp.eq.s32.totalorder %s20, 3
    %p274 = scmp.ne.s32.totalorder %s269, %s271
    %p275 = scmp.eq.s32.totalorder %s20, 0
    %p276 = por %p274, %p275
    %p277 = scmp.ne.s32.totalorder %s269, %s271
    %p278 = scmp.eq.s32.totalorder %s25, 3
    %p279 = por %p277, %p278
    %p280 = scmp.ne.s32.totalorder %s271, %s272
    %p281 = scmp.eq.s32.totalorder %s25, 0
    %p282 = por %p280, %p281
    %p283 = scmp.ne.s32.totalorder %s271, %s272
    %p284 = scmp.eq.s32.totalorder %s26, 3
    %p285 = por %p283, %p284
    %p287 = scmp.ne.s32.totalorder %s272, %s286
    %p288 = scmp.eq.s32.totalorder %s26, 0
    %p289 = por %p287, %p288
    %s290 = ssub.s32 %s20, %s27
    %p291 = scmp.eq.s32.totalorder %s290, 0
    %s293 = sadd.s32 %s292, 1
    %s294 = scalar_select %p291, %s292, %s293
    %p297 = pneg %p291
    %p298 = scmp.eq.s32.totalorder %s20, 3
    %p299 = por %p297, %p298
    %p300 = scmp.ne.s32.totalorder %s292, %s295
    %p301 = scmp.eq.s32.totalorder %s20, 0
    %p302 = por %p300, %p301
    %p303 = scmp.ne.s32.totalorder %s292, %s295
    %p304 = scmp.eq.s32.totalorder %s25, 3
    %p305 = por %p303, %p304
    %p306 = scmp.ne.s32.totalorder %s295, %s296
    %p307 = scmp.eq.s32.totalorder %s25, 0
    %p308 = por %p306, %p307
    %p309 = scmp.ne.s32.totalorder %s295, %s296
    %p310 = scmp.eq.s32.totalorder %s26, 3
    %p311 = por %p309, %p310
    %p313 = scmp.ne.s32.totalorder %s296, %s312
    %p314 = scmp.eq.s32.totalorder %s26, 0
    %p315 = por %p313, %p314
    %p316 = scmp.le.s32.totalorder 1, %s20
    %p317 = scmp.lt.s32.totalorder %s20, 5
    %p318 = pnand %p316, %p317
    %p319 = pneg %p318
    // Predicated region
    $region9: #{tpu_custom_call.1} parent=5 // pred_check
      _
    $region10: #{tpu_custom_call.1} parent=5 // pred_check_branch
      %321 = sbr.rel (%p318) target = $region12
    $region11: #{tpu_custom_call.1} parent=5 // pred_region
      %s322 = ssub.s32 %s20, 1
      // Predicated region
      $region13: #{tpu_custom_call.1} parent=11 // pred_check
        %p323 = pneg %p93
      $region14: #{tpu_custom_call.1} parent=11 // pred_check_branch
        %325 = sbr.rel (%p323) target = $region16
      $region15: #{tpu_custom_call.1} parent=11 // pred_region
        _
      $region16: #{tpu_custom_call.1} parent=11 // pred_fallthru
        _
      // Predicated region
      $region17: #{tpu_custom_call.1} parent=11 // pred_check
        %p326 = pneg %p114
      $region18: #{tpu_custom_call.1} parent=11 // pred_check_branch
        %328 = sbr.rel (%p326) target = $region20
      $region19: #{tpu_custom_call.1} parent=11 // pred_region
        _
      $region20: #{tpu_custom_call.1} parent=11 // pred_fallthru
        _
      // Predicated region
      $region21: #{tpu_custom_call.1} parent=11 // pred_check
        %p329 = pneg %p135
      $region22: #{tpu_custom_call.1} parent=11 // pred_check_branch
        %331 = sbr.rel (%p329) target = $region24
      $region23: #{tpu_custom_call.1} parent=11 // pred_region
        _
      $region24: #{tpu_custom_call.1} parent=11 // pred_fallthru
        _
      // Predicated region
      $region25: #{tpu_custom_call.1} parent=11 // pred_check
        %p332 = pneg %p156
      $region26: #{tpu_custom_call.1} parent=11 // pred_check_branch
        %334 = sbr.rel (%p332) target = $region28
      $region27: #{tpu_custom_call.1} parent=11 // pred_region
        _
      $region28: #{tpu_custom_call.1} parent=11 // pred_fallthru
        _
      // Predicated region
      $region29: #{tpu_custom_call.1} parent=11 // pred_check
        %p335 = pneg %p177
      $region30: #{tpu_custom_call.1} parent=11 // pred_check_branch
        %337 = sbr.rel (%p335) target = $region32
      $region31: #{tpu_custom_call.1} parent=11 // pred_region
        _
      $region32: #{tpu_custom_call.1} parent=11 // pred_fallthru
        _
      // Predicated region
      $region33: #{tpu_custom_call.1} parent=11 // pred_check
        %p338 = pneg %p198
      $region34: #{tpu_custom_call.1} parent=11 // pred_check_branch
        %340 = sbr.rel (%p338) target = $region36
      $region35: #{tpu_custom_call.1} parent=11 // pred_region
        _
      $region36: #{tpu_custom_call.1} parent=11 // pred_fallthru
        _
      // Predicated region
      $region37: #{tpu_custom_call.1} parent=11 // pred_check
        %p341 = pneg %p219
      $region38: #{tpu_custom_call.1} parent=11 // pred_check_branch
        %343 = sbr.rel (%p341) target = $region40
      $region39: #{tpu_custom_call.1} parent=11 // pred_region
        _
      $region40: #{tpu_custom_call.1} parent=11 // pred_fallthru
        _
      // Predicated region
      $region41: #{tpu_custom_call.1} parent=11 // pred_check
        %p344 = pneg %p240
      $region42: #{tpu_custom_call.1} parent=11 // pred_check_branch
        %346 = sbr.rel (%p344) target = $region44
      $region43: #{tpu_custom_call.1} parent=11 // pred_region
        _
      $region44: #{tpu_custom_call.1} parent=11 // pred_fallthru
        _
      // Predicated region
      $region45: #{tpu_custom_call.1} parent=11 // pred_check
        %p347 = pneg %p261
      $region46: #{tpu_custom_call.1} parent=11 // pred_check_branch
        %349 = sbr.rel (%p347) target = $region48
      $region47: #{tpu_custom_call.1} parent=11 // pred_region
        _
      $region48: #{tpu_custom_call.1} parent=11 // pred_fallthru
        _
      // Predicated region
      $region49: #{tpu_custom_call.1} parent=11 // pred_check
        %p350 = pneg %p282
      $region50: #{tpu_custom_call.1} parent=11 // pred_check_branch
        %352 = sbr.rel (%p350) target = $region52
      $region51: #{tpu_custom_call.1} parent=11 // pred_region
        _
      $region52: #{tpu_custom_call.1} parent=11 // pred_fallthru
        _
    $region12: #{tpu_custom_call.1} parent=5 // pred_fallthru
      _
    %p353 = scmp.lt.s32.totalorder %s20, 4
    // Predicated region
    $region53: #{tpu_custom_call.1} parent=5 // pred_check
      %p354 = pneg %p353
    $region54: #{tpu_custom_call.1} parent=5 // pred_check_branch
      %356 = sbr.rel (%p354) target = $region56
    $region55: #{tpu_custom_call.1} parent=5 // pred_region
      // Predicated region
      $region57: #{tpu_custom_call.1} parent=55 // pred_check
        %p357 = pneg %p40
      $region58: #{tpu_custom_call.1} parent=55 // pred_check_branch
        %359 = sbr.rel (%p357) target = $region60
      $region59: #{tpu_custom_call.1} parent=55 // pred_region
        %p360 = scmp.lt.s32.totalorder %s20, 3
        %s361 = scalar_select %p360, %s20, 3
        %s362 = smul.addr %s361, 8
        %s363 = scalar_lea.vmem %s0, %s362
      $region60: #{tpu_custom_call.1} parent=55 // pred_fallthru
        _
      // Predicated region
      $region61: #{tpu_custom_call.1} parent=55 // pred_check
        %p364 = pneg %p66
      $region62: #{tpu_custom_call.1} parent=55 // pred_check_branch
        %366 = sbr.rel (%p364) target = $region64
      $region63: #{tpu_custom_call.1} parent=55 // pred_region
        %p367 = scmp.lt.s32.totalorder %s20, 3
        %s368 = scalar_select %p367, %s20, 3
        %s369 = smul.addr %s368, 7
        %s370 = smul.addr %s369, 8
        %s371 = scalar_lea.vmem %s1, %s370
      $region64: #{tpu_custom_call.1} parent=55 // pred_fallthru
        _
    $region56: #{tpu_custom_call.1} parent=5 // pred_fallthru
      _
    %p372 = scmp.le.s32.totalorder 1, %s20
    %p373 = scmp.lt.s32.totalorder %s20, 5
    %p374 = pnand %p372, %p373
    %p375 = pneg %p374
    // Predicated region
    $region65: #{tpu_custom_call.1} parent=5 // pred_check
      _
    $region66: #{tpu_custom_call.1} parent=5 // pred_check_branch
      %377 = sbr.rel (%p374) target = $region68
    $region67: #{tpu_custom_call.1} parent=5 // pred_region
      %s378 = ssub.s32 %s20, 1
      %p379 = scmp.lt.s32.totalorder %s25, 3
      %s380 = scalar_select %p379, %s25, 3
      %s381 = smul.addr %s380, 8
      %s382 = scalar_lea.vmem %s0, %s381
      %p383 = pneg %p46
      %p384 = pneg %p43
      %p385 = scmp.lt.s32.totalorder %s25, 3
      %s386 = scalar_select %p385, %s25, 3
      %s387 = smul.addr %s386, 7
      %s388 = smul.addr %s387, 8
      %s389 = scalar_lea.vmem %s1, %s388
      %p390 = pneg %p72
      %p391 = pneg %p69
      %p392 = pneg %p93
      %p393 = pneg %p90
      %p394 = pneg %p114
      %p395 = pneg %p111
      %p396 = pneg %p135
      %p397 = pneg %p132
      %p398 = pneg %p156
      %p399 = pneg %p153
      %p400 = pneg %p177
      %p401 = pneg %p174
      %p402 = pneg %p198
      %p403 = pneg %p195
      %p404 = pneg %p219
      %p405 = pneg %p216
      %p406 = pneg %p240
      %p407 = pneg %p237
      %p408 = pneg %p261
      %p409 = pneg %p258
      %p410 = pneg %p282
      %p411 = pneg %p279
      %p412 = pneg %p308
      %p413 = pneg %p305
      %p414 = scmp.lt.s32.totalorder %s25, 3
      %s415 = scalar_select %p414, %s25, 3
      %s416 = smul.addr %s415, 8
      %s417 = scalar_lea.vmem %s12, %s416
      %p418 = scmp.lt.s32.totalorder %s25, 3
      %s419 = scalar_select %p418, %s25, 3
      %s420 = smul.addr %s419, 8
      %s421 = scalar_lea.vmem %s0, %s420
      %p422 = scmp.lt.s32.totalorder %s25, 3
      %s423 = scalar_select %p422, %s25, 3
      %s424 = smul.addr %s423, 7
      %s425 = smul.addr %s424, 8
      %s426 = scalar_lea.vmem %s1, %s425
      %p427 = scmp.lt.s32.totalorder %s25, 3
      %s428 = scalar_select %p427, %s25, 3
      %s429 = smul.addr %s428, 8
      %s430 = scalar_lea.vmem %s12, %s429
      %v431 = vld [vmem:[%s421] sm:$0xff]
      %v432 = vld [vmem:[%s426] sm:$0xff]
      %v433 = vld [vmem:[%s426 + $0x8] sm:$0xff]
      %v434 = vld [vmem:[%s426 + $0x10] sm:$0xff]
      %v435 = vld [vmem:[%s426 + $0x18] sm:$0xff]
      %v436 = vld [vmem:[%s426 + $0x20] sm:$0xff]
      %v437 = vld [vmem:[%s426 + $0x28] sm:$0xff]
      %v438 = vld [vmem:[%s426 + $0x30] sm:$0xff]
      %v439 = vld [vmem:[%s2] sm:$0xf]
      %v440 = vld [vmem:[%s2 + $0x4] sm:$0xf]
      %v441 = vld [vmem:[%s2 + $0x8] sm:$0xf]
      %v442 = vld [vmem:[%s2 + $0xc] sm:$0xf]
      %v443 = vld [vmem:[%s2 + $0x10] sm:$0xf]
      %v444 = vld [vmem:[%s2 + $0x14] sm:$0xf]
      %v445 = vld [vmem:[%s2 + $0x18] sm:$0xf]
      %v446 = vunpack.c.l.bf16 %v439
      %v447 = vunpack.c.l.bf16 %v440
      %v448 = vunpack.c.l.bf16 %v441
      %v449 = vunpack.c.l.bf16 %v442
      %v450 = vunpack.c.l.bf16 %v443
      %v451 = vunpack.c.l.bf16 %v444
      %v452 = vunpack.c.l.bf16 %v445
      %v453 = vld [vmem:[%s3] sm:$0xff]
      %v454 = vld [vmem:[%s3 + $0x8] sm:$0xff]
      %v455 = vld [vmem:[%s3 + $0x10] sm:$0xff]
      %v456 = vld [vmem:[%s3 + $0x18] sm:$0xff]
      %v457 = vld [vmem:[%s3 + $0x20] sm:$0xff]
      %v458 = vld [vmem:[%s3 + $0x28] sm:$0xff]
      %v459 = vld [vmem:[%s3 + $0x30] sm:$0xff]
      %v460 = vld [vmem:[%s4] sm:$0xf]
      %v461 = vld [vmem:[%s5] sm:$0x1]
      %v462 = vld [vmem:[%s6] sm:$0xff]
      %v463 = vld [vmem:[%s6 + $0x8] sm:$0xff]
      %v464 = vld [vmem:[%s6 + $0x10] sm:$0xff]
      %v465 = vld [vmem:[%s6 + $0x18] sm:$0xff]
      %v466 = vld [vmem:[%s7] sm:$0x1]
      %v467 = vld [vmem:[%s8] sm:$0xff]
      %v468 = vld [vmem:[%s8 + $0x8] sm:$0xff]
      %v469 = vld [vmem:[%s8 + $0x10] sm:$0xff]
      %v470 = vld [vmem:[%s8 + $0x18] sm:$0xff]
      %v471 = vld [vmem:[%s8 + $0x20] sm:$0x7]
      %v472 = vld [vmem:[%s9] sm:$0x1]
      %v473 = vld [vmem:[%s10] sm:$0xff]
      %v474 = vld [vmem:[%s10 + $0x8] sm:$0xff]
      %v475 = vld [vmem:[#allocation2] sm:$0x1]
      %vm476 = vcmask 15360
      %v478 = vsel %vm476, %v431, 0
      %vm480 = vcmask 1041408
      %v482 = vsel %vm480, %v460, 0
      %484 = vmatprep.subr.mxu0 0.0
      %485 = vmatpush1.msra.mxu0 %v482
      %486 = vmatprep.subr.mxu0 0.0
      %487 = vmatpush1.msra.mxu0 0.0
      %488 = vmatprep.subr.mxu0 0.0
      %489 = vmatpush1.msra.mxu0 0.0
      %490 = vmatprep.subr.mxu0 0.0
      %491 = vmatpush1.msra.mxu0 0.0
      %492 = vmatprep.subr.mxu0 0.0
      %493 = vmatpush1.msra.mxu0 0.0
      %494 = vmatprep.subr.mxu0 0.0
      %495 = vmatpush1.msra.mxu0 0.0
      %496 = vmatprep.subr.mxu0 0.0
      %497 = vmatpush1.msra.mxu0 0.0
      %498 = vmatprep.subr.mxu0 0.0
      %499 = vmatpush1.msra.mxu0 0.0
      %500 = vmatprep.subr.mxu0 0.0
      %501 = vmatpush1.msra.mxu0 0.0
      %502 = vmatprep.subr.mxu0 0.0
      %503 = vmatpush1.msra.mxu0 0.0
      %504 = vmatprep.subr.mxu0 0.0
      %505 = vmatpush1.msra.mxu0 0.0
      %506 = vmatprep.subr.mxu0 0.0
      %507 = vmatpush1.msra.mxu0 0.0
      %508 = vmatprep.subr.mxu0 0.0
      %509 = vmatpush1.msra.mxu0 0.0
      %510 = vmatprep.subr.mxu0 0.0
      %511 = vmatpush1.msra.mxu0 0.0
      %512 = vmatprep.subr.mxu0 0.0
      %513 = vmatpush1.msra.mxu0 0.0
      %514 = vmatprep.subr.mxu0 0.0
      %515 = vmatpush1.msra.mxu0 0.0
      %516 = vmatprep.subr.mxu0 0.0
      %517 = vmatpush1.msra.mxu0 0.0
      %518 = vmatprep.subr.mxu0 0.0
      %519 = vmatpush1.msra.mxu0 0.0
      %520 = vmatprep.subr.mxu0 0.0
      %521 = vmatpush1.msra.mxu0 0.0
      %522 = vmatprep.subr.mxu0 0.0
      %523 = vmatpush1.msra.mxu0 0.0
      %524 = vmatprep.subr.mxu0 0.0
      %525 = vmatpush1.msra.mxu0 0.0
      %526 = vmatprep.subr.mxu0 0.0
      %527 = vmatpush1.msra.mxu0 0.0
      %528 = vmatprep.subr.mxu0 0.0
      %529 = vmatpush1.msra.mxu0 0.0
      %530 = vmatprep.subr.mxu0 0.0
      %531 = vmatpush1.msra.mxu0 0.0
      %532 = vmatprep.subr.mxu0 0.0
      %533 = vmatpush1.msra.mxu0 0.0
      %534 = vmatprep.subr.mxu0 0.0
      %535 = vmatpush1.msra.mxu0 0.0
      %536 = vmatprep.subr.mxu0 0.0
      %537 = vmatpush1.msra.mxu0 0.0
      %538 = vmatprep.subr.mxu0 0.0
      %539 = vmatpush1.msra.mxu0 0.0
      %540 = vmatprep.subr.mxu0 0.0
      %541 = vmatpush1.msra.mxu0 0.0
      %542 = vmatprep.subr.mxu0 0.0
      %543 = vmatpush1.msra.mxu0 0.0
      %544 = vmatprep.subr.mxu0 0.0
      %545 = vmatpush1.msra.mxu0 0.0
      %546 = vmatprep.subr.mxu0 0.0
      %547 = vmatpush1.msra.mxu0 0.0
      %548 = vmatprep.mubr.f32.mxu0 0.0
      %549 = vmatmul.mubr.f32.gmra.mrb[0].mxu0 %v478
      %v550 = vpop.f32.mrb[0].mxu0
      %v551 = vadd.f32 0.0, %v550
      %v552 = vpop.f32.mrb[0].mxu0
      %553 = vdwg.mxu0
      %v554 = vrot.slane %v460, 3
      %vm555 = vcmask 7168
      %v557 = vsel %vm555, %v432, 0
      %v560 = vsel %vm555, %v433, 0
      %v563 = vsel %vm555, %v434, 0
      %v566 = vsel %vm555, %v435, 0
      %v569 = vsel %vm555, %v436, 0
      %v572 = vsel %vm555, %v437, 0
      %v575 = vsel %vm555, %v438, 0
      %vm577 = vcmask 1040384
      %v578 = vsel %vm577, %v554, 0
      %580 = vmatprep.subr.mxu0 0.0
      %581 = vmatpush1.msra.mxu0 %v578
      %582 = vmatprep.subr.mxu0 0.0
      %583 = vmatpush1.msra.mxu0 0.0
      %584 = vmatprep.subr.mxu0 0.0
      %585 = vmatpush1.msra.mxu0 0.0
      %586 = vmatprep.subr.mxu0 0.0
      %587 = vmatpush1.msra.mxu0 0.0
      %588 = vmatprep.subr.mxu0 0.0
      %589 = vmatpush1.msra.mxu0 0.0
      %590 = vmatprep.subr.mxu0 0.0
      %591 = vmatpush1.msra.mxu0 0.0
      %592 = vmatprep.subr.mxu0 0.0
      %593 = vmatpush1.msra.mxu0 0.0
      %594 = vmatprep.subr.mxu0 0.0
      %595 = vmatpush1.msra.mxu0 0.0
      %596 = vmatprep.subr.mxu0 0.0
      %597 = vmatpush1.msra.mxu0 0.0
      %598 = vmatprep.subr.mxu0 0.0
      %599 = vmatpush1.msra.mxu0 0.0
      %600 = vmatprep.subr.mxu0 0.0
      %601 = vmatpush1.msra.mxu0 0.0
      %602 = vmatprep.subr.mxu0 0.0
      %603 = vmatpush1.msra.mxu0 0.0
      %604 = vmatprep.subr.mxu0 0.0
      %605 = vmatpush1.msra.mxu0 0.0
      %606 = vmatprep.subr.mxu0 0.0
      %607 = vmatpush1.msra.mxu0 0.0
      %608 = vmatprep.subr.mxu0 0.0
      %609 = vmatpush1.msra.mxu0 0.0
      %610 = vmatprep.subr.mxu0 0.0
      %611 = vmatpush1.msra.mxu0 0.0
      %612 = vmatprep.subr.mxu0 0.0
      %613 = vmatpush1.msra.mxu0 0.0
      %614 = vmatprep.subr.mxu0 0.0
      %615 = vmatpush1.msra.mxu0 0.0
      %616 = vmatprep.subr.mxu0 0.0
      %617 = vmatpush1.msra.mxu0 0.0
      %618 = vmatprep.subr.mxu0 0.0
      %619 = vmatpush1.msra.mxu0 0.0
      %620 = vmatprep.subr.mxu0 0.0
      %621 = vmatpush1.msra.mxu0 0.0
      %622 = vmatprep.subr.mxu0 0.0
      %623 = vmatpush1.msra.mxu0 0.0
      %624 = vmatprep.subr.mxu0 0.0
      %625 = vmatpush1.msra.mxu0 0.0
      %626 = vmatprep.subr.mxu0 0.0
      %627 = vmatpush1.msra.mxu0 0.0
      %628 = vmatprep.subr.mxu0 0.0
      %629 = vmatpush1.msra.mxu0 0.0
      %630 = vmatprep.subr.mxu0 0.0
      %631 = vmatpush1.msra.mxu0 0.0
      %632 = vmatprep.subr.mxu0 0.0
      %633 = vmatpush1.msra.mxu0 0.0
      %634 = vmatprep.subr.mxu0 0.0
      %635 = vmatpush1.msra.mxu0 0.0
      %636 = vmatprep.subr.mxu0 0.0
      %637 = vmatpush1.msra.mxu0 0.0
      %638 = vmatprep.subr.mxu0 0.0
      %639 = vmatpush1.msra.mxu0 0.0
      %640 = vmatprep.subr.mxu0 0.0
      %641 = vmatpush1.msra.mxu0 0.0
      %642 = vmatprep.subr.mxu0 0.0
      %643 = vmatpush1.msra.mxu0 0.0
      %644 = vmatprep.mubr.f32.mxu0 0.0
      %645 = vmatmul.mubr.f32.gmra.mrb[0].mxu0 %v557
      %v646 = vpop.f32.mrb[0].mxu0
      %v647 = vadd.f32 0.0, %v646
      %v648 = vpop.f32.mrb[0].mxu0
      %649 = vmatprep.mubr.f32.mxu0 0.0
      %650 = vmatmul.mubr.f32.gmra.mrb[0].mxu0 %v560
      %v651 = vpop.f32.mrb[0].mxu0
      %v652 = vadd.f32 0.0, %v651
      %v653 = vpop.f32.mrb[0].mxu0
      %654 = vmatprep.mubr.f32.mxu0 0.0
      %655 = vmatmul.mubr.f32.gmra.mrb[0].mxu0 %v563
      %v656 = vpop.f32.mrb[0].mxu0
      %v657 = vadd.f32 0.0, %v656
      %v658 = vpop.f32.mrb[0].mxu0
      %659 = vmatprep.mubr.f32.mxu0 0.0
      %660 = vmatmul.mubr.f32.gmra.mrb[0].mxu0 %v566
      %v661 = vpop.f32.mrb[0].mxu0
      %v662 = vadd.f32 0.0, %v661
      %v663 = vpop.f32.mrb[0].mxu0
      %664 = vmatprep.mubr.f32.mxu0 0.0
      %665 = vmatmul.mubr.f32.gmra.mrb[0].mxu0 %v569
      %v666 = vpop.f32.mrb[0].mxu0
      %v667 = vadd.f32 0.0, %v666
      %v668 = vpop.f32.mrb[0].mxu0
      %669 = vmatprep.mubr.f32.mxu0 0.0
      %670 = vmatmul.mubr.f32.gmra.mrb[0].mxu0 %v572
      %v671 = vpop.f32.mrb[0].mxu0
      %v672 = vadd.f32 0.0, %v671
      %v673 = vpop.f32.mrb[0].mxu0
      %674 = vmatprep.mubr.f32.mxu0 0.0
      %675 = vmatmul.mubr.f32.gmra.mrb[0].mxu0 %v575
      %v676 = vpop.f32.mrb[0].mxu0
      %v677 = vadd.f32 0.0, %v676
      %v678 = vpop.f32.mrb[0].mxu0
      %679 = vdwg.mxu0
      %vm680 = vcmask 64512
      %v682 = vsel %vm680, %v446, 0
      %v685 = vsel %vm680, %v447, 0
      %v688 = vsel %vm680, %v448, 0
      %v691 = vsel %vm680, %v449, 0
      %v694 = vsel %vm680, %v450, 0
      %v697 = vsel %vm680, %v451, 0
      %v700 = vsel %vm680, %v452, 0
      %702 = vmatprep.subr.mxu0 0.0
      %703 = vmatpush1.msra.mxu0 %v551
      %704 = vmatprep.subr.mxu0 0.0
      %705 = vmatpush1.msra.mxu0 0.0
      %706 = vmatprep.subr.mxu0 0.0
      %707 = vmatpush1.msra.mxu0 0.0
      %708 = vmatprep.subr.mxu0 0.0
      %709 = vmatpush1.msra.mxu0 0.0
      %710 = vmatprep.subr.mxu0 0.0
      %711 = vmatpush1.msra.mxu0 0.0
      %712 = vmatprep.subr.mxu0 0.0
      %713 = vmatpush1.msra.mxu0 0.0
      %714 = vmatprep.subr.mxu0 0.0
      %715 = vmatpush1.msra.mxu0 0.0
      %716 = vmatprep.subr.mxu0 0.0
      %717 = vmatpush1.msra.mxu0 0.0
      %718 = vmatprep.subr.mxu0 0.0
      %719 = vmatpush1.msra.mxu0 0.0
      %720 = vmatprep.subr.mxu0 0.0
      %721 = vmatpush1.msra.mxu0 0.0
      %722 = vmatprep.subr.mxu0 0.0
      %723 = vmatpush1.msra.mxu0 0.0
      %724 = vmatprep.subr.mxu0 0.0
      %725 = vmatpush1.msra.mxu0 0.0
      %726 = vmatprep.subr.mxu0 0.0
      %727 = vmatpush1.msra.mxu0 0.0
      %728 = vmatprep.subr.mxu0 0.0
      %729 = vmatpush1.msra.mxu0 0.0
      %730 = vmatprep.subr.mxu0 0.0
      %731 = vmatpush1.msra.mxu0 0.0
      %732 = vmatprep.subr.mxu0 0.0
      %733 = vmatpush1.msra.mxu0 0.0
      %734 = vmatprep.subr.mxu0 0.0
      %735 = vmatpush1.msra.mxu0 0.0
      %736 = vmatprep.subr.mxu0 0.0
      %737 = vmatpush1.msra.mxu0 0.0
      %738 = vmatprep.subr.mxu0 0.0
      %739 = vmatpush1.msra.mxu0 0.0
      %740 = vmatprep.subr.mxu0 0.0
      %741 = vmatpush1.msra.mxu0 0.0
      %742 = vmatprep.subr.mxu0 0.0
      %743 = vmatpush1.msra.mxu0 0.0
      %744 = vmatprep.subr.mxu0 0.0
      %745 = vmatpush1.msra.mxu0 0.0
      %746 = vmatprep.subr.mxu0 0.0
      %747 = vmatpush1.msra.mxu0 0.0
      %748 = vmatprep.subr.mxu0 0.0
      %749 = vmatpush1.msra.mxu0 0.0
      %750 = vmatprep.subr.mxu0 0.0
      %751 = vmatpush1.msra.mxu0 0.0
      %752 = vmatprep.subr.mxu0 0.0
      %753 = vmatpush1.msra.mxu0 0.0
      %754 = vmatprep.subr.mxu0 0.0
      %755 = vmatpush1.msra.mxu0 0.0
      %756 = vmatprep.subr.mxu0 0.0
      %757 = vmatpush1.msra.mxu0 0.0
      %758 = vmatprep.subr.mxu0 0.0
      %759 = vmatpush1.msra.mxu0 0.0
      %760 = vmatprep.subr.mxu0 0.0
      %761 = vmatpush1.msra.mxu0 0.0
      %762 = vmatprep.subr.mxu0 0.0
      %763 = vmatpush1.msra.mxu0 0.0
      %764 = vmatprep.subr.mxu0 0.0
      %765 = vmatpush1.msra.mxu0 0.0
      %766 = vmatprep.mubr.f32.mxu0 0.0
      %767 = vmatmul.mubr.f32.gmra.mrb[0].mxu0 %v682
      %v768 = vpop.f32.mrb[0].mxu0
      %v769 = vadd.f32 %v647, %v768
      %v770 = vpop.f32.mrb[0].mxu0
      %771 = vmatprep.mubr.f32.mxu0 0.0
      %772 = vmatmul.mubr.f32.gmra.mrb[0].mxu0 %v685
      %v773 = vpop.f32.mrb[0].mxu0
      %v774 = vadd.f32 %v652, %v773
      %v775 = vpop.f32.mrb[0].mxu0
      %776 = vmatprep.mubr.f32.mxu0 0.0
      %777 = vmatmul.mubr.f32.gmra.mrb[0].mxu0 %v688
      %v778 = vpop.f32.mrb[0].mxu0
      %v779 = vadd.f32 %v657, %v778
      %v780 = vpop.f32.mrb[0].mxu0
      %781 = vmatprep.mubr.f32.mxu0 0.0
      %782 = vmatmul.mubr.f32.gmra.mrb[0].mxu0 %v691
      %v783 = vpop.f32.mrb[0].mxu0
      %v784 = vadd.f32 %v662, %v783
      %v785 = vpop.f32.mrb[0].mxu0
      %786 = vmatprep.mubr.f32.mxu0 0.0
      %787 = vmatmul.mubr.f32.gmra.mrb[0].mxu0 %v694
      %v788 = vpop.f32.mrb[0].mxu0
      %v789 = vadd.f32 %v667, %v788
      %v790 = vpop.f32.mrb[0].mxu0
      %791 = vmatprep.mubr.f32.mxu0 0.0
      %792 = vmatmul.mubr.f32.gmra.mrb[0].mxu0 %v697
      %v793 = vpop.f32.mrb[0].mxu0
      %v794 = vadd.f32 %v672, %v793
      %v795 = vpop.f32.mrb[0].mxu0
      %796 = vmatprep.mubr.f32.mxu0 0.0
      %797 = vmatmul.mubr.f32.gmra.mrb[0].mxu0 %v700
      %v798 = vpop.f32.mrb[0].mxu0
      %v799 = vadd.f32 %v677, %v798
      %v800 = vpop.f32.mrb[0].mxu0
      %801 = vdwg.mxu0
      %v803 = vlaneseq
      %v804 = vshrl.u32 %v803, 7
      %v805 = vsub.s32 0, %v804
      %v806 = vrot.slane %v461, %v805
      %v808 = vadd.f32 %v769, %v806
      %v809 = vadd.f32 %v774, %v806
      %v810 = vadd.f32 %v779, %v806
      %v811 = vadd.f32 %v784, %v806
      %v812 = vadd.f32 %v789, %v806
      %v813 = vadd.f32 %v794, %v806
      %v814 = vadd.f32 %v799, %v806
      %v816 = vlaneseq
      %v817 = vshrl.u32 %v816, 7
      %v818 = vsub.s32 0, %v817
      %v819 = vrot.slane %v472, %v818
      %v822 = vsel %vm480, %v467, 0
      %824 = vmatprep.subr.mxu0 0.0
      %825 = vmatpush1.msra.mxu0 %v822
      %826 = vmatprep.subr.mxu0 0.0
      %827 = vmatpush1.msra.mxu0 0.0
      %828 = vmatprep.subr.mxu0 0.0
      %829 = vmatpush1.msra.mxu0 0.0
      %830 = vmatprep.subr.mxu0 0.0
      %831 = vmatpush1.msra.mxu0 0.0
      %832 = vmatprep.subr.mxu0 0.0
      %833 = vmatpush1.msra.mxu0 0.0
      %834 = vmatprep.subr.mxu0 0.0
      %835 = vmatpush1.msra.mxu0 0.0
      %836 = vmatprep.subr.mxu0 0.0
      %837 = vmatpush1.msra.mxu0 0.0
      %838 = vmatprep.subr.mxu0 0.0
      %839 = vmatpush1.msra.mxu0 0.0
      %840 = vmatprep.subr.mxu0 0.0
      %841 = vmatpush1.msra.mxu0 0.0
      %842 = vmatprep.subr.mxu0 0.0
      %843 = vmatpush1.msra.mxu0 0.0
      %844 = vmatprep.subr.mxu0 0.0
      %845 = vmatpush1.msra.mxu0 0.0
      %846 = vmatprep.subr.mxu0 0.0
      %847 = vmatpush1.msra.mxu0 0.0
      %848 = vmatprep.subr.mxu0 0.0
      %849 = vmatpush1.msra.mxu0 0.0
      %850 = vmatprep.subr.mxu0 0.0
      %851 = vmatpush1.msra.mxu0 0.0
      %852 = vmatprep.subr.mxu0 0.0
      %853 = vmatpush1.msra.mxu0 0.0
      %854 = vmatprep.subr.mxu0 0.0
      %855 = vmatpush1.msra.mxu0 0.0
      %856 = vmatprep.subr.mxu0 0.0
      %857 = vmatpush1.msra.mxu0 0.0
      %858 = vmatprep.subr.mxu0 0.0
      %859 = vmatpush1.msra.mxu0 0.0
      %860 = vmatprep.subr.mxu0 0.0
      %861 = vmatpush1.msra.mxu0 0.0
      %862 = vmatprep.subr.mxu0 0.0
      %863 = vmatpush1.msra.mxu0 0.0
      %864 = vmatprep.subr.mxu0 0.0
      %865 = vmatpush1.msra.mxu0 0.0
      %866 = vmatprep.subr.mxu0 0.0
      %867 = vmatpush1.msra.mxu0 0.0
      %868 = vmatprep.subr.mxu0 0.0
      %869 = vmatpush1.msra.mxu0 0.0
      %870 = vmatprep.subr.mxu0 0.0
      %871 = vmatpush1.msra.mxu0 0.0
      %872 = vmatprep.subr.mxu0 0.0
      %873 = vmatpush1.msra.mxu0 0.0
      %874 = vmatprep.subr.mxu0 0.0
      %875 = vmatpush1.msra.mxu0 0.0
      %876 = vmatprep.subr.mxu0 0.0
      %877 = vmatpush1.msra.mxu0 0.0
      %878 = vmatprep.subr.mxu0 0.0
      %879 = vmatpush1.msra.mxu0 0.0
      %880 = vmatprep.subr.mxu0 0.0
      %881 = vmatpush1.msra.mxu0 0.0
      %882 = vmatprep.subr.mxu0 0.0
      %883 = vmatpush1.msra.mxu0 0.0
      %884 = vmatprep.subr.mxu0 0.0
      %885 = vmatpush1.msra.mxu0 0.0
      %886 = vmatprep.subr.mxu0 0.0
      %887 = vmatpush1.msra.mxu0 0.0
      %888 = vmatprep.mubr.f32.mxu0 0.0
      %889 = vmatmul.mubr.f32.gmra.mrb[0].mxu0 %v478
      %v890 = vpop.f32.mrb[0].mxu0
      %v891 = vadd.f32 %v819, %v890
      %v892 = vpop.f32.mrb[0].mxu0
      %893 = vdwg.mxu0
      %894 = vrot.lane.b32.xlu0 %v431, 126
      %v895 = vpop.permute.xlu0 %894
      %v896 = vrot.slane %v460, 2
      %v897 = vsel %vm555, %v895, 0
      %v899 = vsel %vm577, %v896, 0
      %901 = vmatprep.subr.mxu0 0.0
      %902 = vmatpush1.msra.mxu0 %v899
      %903 = vmatprep.subr.mxu0 0.0
      %904 = vmatpush1.msra.mxu0 0.0
      %905 = vmatprep.subr.mxu0 0.0
      %906 = vmatpush1.msra.mxu0 0.0
      %907 = vmatprep.subr.mxu0 0.0
      %908 = vmatpush1.msra.mxu0 0.0
      %909 = vmatprep.subr.mxu0 0.0
      %910 = vmatpush1.msra.mxu0 0.0
      %911 = vmatprep.subr.mxu0 0.0
      %912 = vmatpush1.msra.mxu0 0.0
      %913 = vmatprep.subr.mxu0 0.0
      %914 = vmatpush1.msra.mxu0 0.0
      %915 = vmatprep.subr.mxu0 0.0
      %916 = vmatpush1.msra.mxu0 0.0
      %917 = vmatprep.subr.mxu0 0.0
      %918 = vmatpush1.msra.mxu0 0.0
      %919 = vmatprep.subr.mxu0 0.0
      %920 = vmatpush1.msra.mxu0 0.0
      %921 = vmatprep.subr.mxu0 0.0
      %922 = vmatpush1.msra.mxu0 0.0
      %923 = vmatprep.subr.mxu0 0.0
      %924 = vmatpush1.msra.mxu0 0.0
      %925 = vmatprep.subr.mxu0 0.0
      %926 = vmatpush1.msra.mxu0 0.0
      %927 = vmatprep.subr.mxu0 0.0
      %928 = vmatpush1.msra.mxu0 0.0
      %929 = vmatprep.subr.mxu0 0.0
      %930 = vmatpush1.msra.mxu0 0.0
      %931 = vmatprep.subr.mxu0 0.0
      %932 = vmatpush1.msra.mxu0 0.0
      %933 = vmatprep.subr.mxu0 0.0
      %934 = vmatpush1.msra.mxu0 0.0
      %935 = vmatprep.subr.mxu0 0.0
      %936 = vmatpush1.msra.mxu0 0.0
      %937 = vmatprep.subr.mxu0 0.0
      %938 = vmatpush1.msra.mxu0 0.0
      %939 = vmatprep.subr.mxu0 0.0
      %940 = vmatpush1.msra.mxu0 0.0
      %941 = vmatprep.subr.mxu0 0.0
      %942 = vmatpush1.msra.mxu0 0.0
      %943 = vmatprep.subr.mxu0 0.0
      %944 = vmatpush1.msra.mxu0 0.0
      %945 = vmatprep.subr.mxu0 0.0
      %946 = vmatpush1.msra.mxu0 0.0
      %947 = vmatprep.subr.mxu0 0.0
      %948 = vmatpush1.msra.mxu0 0.0
      %949 = vmatprep.subr.mxu0 0.0
      %950 = vmatpush1.msra.mxu0 0.0
      %951 = vmatprep.subr.mxu0 0.0
      %952 = vmatpush1.msra.mxu0 0.0
      %953 = vmatprep.subr.mxu0 0.0
      %954 = vmatpush1.msra.mxu0 0.0
      %955 = vmatprep.subr.mxu0 0.0
      %956 = vmatpush1.msra.mxu0 0.0
      %957 = vmatprep.subr.mxu0 0.0
      %958 = vmatpush1.msra.mxu0 0.0
      %959 = vmatprep.subr.mxu0 0.0
      %960 = vmatpush1.msra.mxu0 0.0
      %961 = vmatprep.subr.mxu0 0.0
      %962 = vmatpush1.msra.mxu0 0.0
      %963 = vmatprep.subr.mxu0 0.0
      %964 = vmatpush1.msra.mxu0 0.0
      %965 = vmatprep.mubr.f32.mxu0 0.0
      %966 = vmatmul.mubr.f32.gmra.mrb[0].mxu0 %v897
      %v967 = vpop.f32.mrb[0].mxu0
      %v968 = vadd.f32 0.0, %v967
      %v969 = vpop.f32.mrb[0].mxu0
      %970 = vdwg.mxu0
      %971 = vmatprep.subr.mxu0 0.0
      %972 = vmatpush1.msra.mxu0 %v968
      %973 = vmatprep.subr.mxu0 0.0
      %974 = vmatpush1.msra.mxu0 0.0
      %975 = vmatprep.subr.mxu0 0.0
      %976 = vmatpush1.msra.mxu0 0.0
      %977 = vmatprep.subr.mxu0 0.0
      %978 = vmatpush1.msra.mxu0 0.0
      %979 = vmatprep.subr.mxu0 0.0
      %980 = vmatpush1.msra.mxu0 0.0
      %981 = vmatprep.subr.mxu0 0.0
      %982 = vmatpush1.msra.mxu0 0.0
      %983 = vmatprep.subr.mxu0 0.0
      %984 = vmatpush1.msra.mxu0 0.0
      %985 = vmatprep.subr.mxu0 0.0
      %986 = vmatpush1.msra.mxu0 0.0
      %987 = vmatprep.subr.mxu0 0.0
      %988 = vmatpush1.msra.mxu0 0.0
      %989 = vmatprep.subr.mxu0 0.0
      %990 = vmatpush1.msra.mxu0 0.0
      %991 = vmatprep.subr.mxu0 0.0
      %992 = vmatpush1.msra.mxu0 0.0
      %993 = vmatprep.subr.mxu0 0.0
      %994 = vmatpush1.msra.mxu0 0.0
      %995 = vmatprep.subr.mxu0 0.0
      %996 = vmatpush1.msra.mxu0 0.0
      %997 = vmatprep.subr.mxu0 0.0
      %998 = vmatpush1.msra.mxu0 0.0
      %999 = vmatprep.subr.mxu0 0.0
      %1000 = vmatpush1.msra.mxu0 0.0
      %1001 = vmatprep.subr.mxu0 0.0
      %1002 = vmatpush1.msra.mxu0 0.0
      %1003 = vmatprep.subr.mxu0 0.0
      %1004 = vmatpush1.msra.mxu0 0.0
      %1005 = vmatprep.subr.mxu0 0.0
      %1006 = vmatpush1.msra.mxu0 0.0
      %1007 = vmatprep.subr.mxu0 0.0
      %1008 = vmatpush1.msra.mxu0 0.0
      %1009 = vmatprep.subr.mxu0 0.0
      %1010 = vmatpush1.msra.mxu0 0.0
      %1011 = vmatprep.subr.mxu0 0.0
      %1012 = vmatpush1.msra.mxu0 0.0
      %1013 = vmatprep.subr.mxu0 0.0
      %1014 = vmatpush1.msra.mxu0 0.0
      %1015 = vmatprep.subr.mxu0 0.0
      %1016 = vmatpush1.msra.mxu0 0.0
      %1017 = vmatprep.subr.mxu0 0.0
      %1018 = vmatpush1.msra.mxu0 0.0
      %1019 = vmatprep.subr.mxu0 0.0
      %1020 = vmatpush1.msra.mxu0 0.0
      %1021 = vmatprep.subr.mxu0 0.0
      %1022 = vmatpush1.msra.mxu0 0.0
      %1023 = vmatprep.subr.mxu0 0.0
      %1024 = vmatpush1.msra.mxu0 0.0
      %1025 = vmatprep.subr.mxu0 0.0
      %1026 = vmatpush1.msra.mxu0 0.0
      %1027 = vmatprep.subr.mxu0 0.0
      %1028 = vmatpush1.msra.mxu0 0.0
      %1029 = vmatprep.subr.mxu0 0.0
      %1030 = vmatpush1.msra.mxu0 0.0
      %1031 = vmatprep.subr.mxu0 0.0
      %1032 = vmatpush1.msra.mxu0 0.0
      %1033 = vmatprep.subr.mxu0 0.0
      %1034 = vmatpush1.msra.mxu0 0.0
      %1035 = vmatprep.mubr.f32.mxu0 0.0
      %1036 = vmatmul.mubr.f32.gmra.mrb[0].mxu0 %v682
      %v1037 = vpop.f32.mrb[0].mxu0
      %v1038 = vadd.f32 0.0, %v1037
      %v1039 = vpop.f32.mrb[0].mxu0
      %1040 = vmatprep.mubr.f32.mxu0 0.0
      %1041 = vmatmul.mubr.f32.gmra.mrb[0].mxu0 %v685
      %v1042 = vpop.f32.mrb[0].mxu0
      %v1043 = vadd.f32 0.0, %v1042
      %v1044 = vpop.f32.mrb[0].mxu0
      %1045 = vmatprep.mubr.f32.mxu0 0.0
      %1046 = vmatmul.mubr.f32.gmra.mrb[0].mxu0 %v688
      %v1047 = vpop.f32.mrb[0].mxu0
      %v1048 = vadd.f32 0.0, %v1047
      %v1049 = vpop.f32.mrb[0].mxu0
      %1050 = vmatprep.mubr.f32.mxu0 0.0
      %1051 = vmatmul.mubr.f32.gmra.mrb[0].mxu0 %v691
      %v1052 = vpop.f32.mrb[0].mxu0
      %v1053 = vadd.f32 0.0, %v1052
      %v1054 = vpop.f32.mrb[0].mxu0
      %1055 = vmatprep.mubr.f32.mxu0 0.0
      %1056 = vmatmul.mubr.f32.gmra.mrb[0].mxu0 %v694
      %v1057 = vpop.f32.mrb[0].mxu0
      %v1058 = vadd.f32 0.0, %v1057
      %v1059 = vpop.f32.mrb[0].mxu0
      %1060 = vmatprep.mubr.f32.mxu0 0.0
      %1061 = vmatmul.mubr.f32.gmra.mrb[0].mxu0 %v697
      %v1062 = vpop.f32.mrb[0].mxu0
      %v1063 = vadd.f32 0.0, %v1062
      %v1064 = vpop.f32.mrb[0].mxu0
      %1065 = vmatprep.mubr.f32.mxu0 0.0
      %1066 = vmatmul.mubr.f32.gmra.mrb[0].mxu0 %v700
      %v1067 = vpop.f32.mrb[0].mxu0
      %v1068 = vadd.f32 0.0, %v1067
      %v1069 = vpop.f32.mrb[0].mxu0
      %1070 = vdwg.mxu0
      %v1071 = vadd.f32 %v808, %v1038
      %v1072 = vadd.f32 %v809, %v1043
      %v1073 = vadd.f32 %v810, %v1048
      %v1074 = vadd.f32 %v811, %v1053
      %v1075 = vadd.f32 %v812, %v1058
      %v1076 = vadd.f32 %v813, %v1063
      %v1077 = vadd.f32 %v814, %v1068
      %v1078 = vmax.f32 %v1071, 0.0
      %v1079 = vmax.f32 %v1072, 0.0
      %v1080 = vmax.f32 %v1073, 0.0
      %v1081 = vmax.f32 %v1074, 0.0
      %v1082 = vmax.f32 %v1075, 0.0
      %v1083 = vmax.f32 %v1076, 0.0
      %v1084 = vmax.f32 %v1077, 0.0
      %v1086 = vlaneseq
      %v1087 = vshrl.u32 %v1086, 7
      %v1088 = vsub.s32 0, %v1087
      %v1089 = vrot.slane %v466, %v1088
      %vm1091 = vcmask 261120
      %v1093 = vsel %vm1091, %v1078, 0
      %v1096 = vsel %vm1091, %v1079, 0
      %v1099 = vsel %vm1091, %v1080, 0
      %v1102 = vsel %vm1091, %v1081, 0
      %v1105 = vsel %vm1091, %v1082, 0
      %v1108 = vsel %vm1091, %v1083, 0
      %v1111 = vsel %vm1091, %v1084, 0
      %1113 = vmatprep.subr.mxu0 0.0
      %1114 = vmatpush1.msra.mxu0 %v462
      %1115 = vmatprep.subr.mxu0 0.0
      %1116 = vmatpush1.msra.mxu0 %v463
      %1117 = vmatprep.subr.mxu0 0.0
      %1118 = vmatpush1.msra.mxu0 %v464
      %1119 = vmatprep.subr.mxu0 0.0
      %1120 = vmatpush1.msra.mxu0 %v465
      %1121 = vmatprep.subr.mxu0 0.0
      %1122 = vmatpush1.msra.mxu0 0.0
      %1123 = vmatprep.subr.mxu0 0.0
      %1124 = vmatpush1.msra.mxu0 0.0
      %1125 = vmatprep.subr.mxu0 0.0
      %1126 = vmatpush1.msra.mxu0 0.0
      %1127 = vmatprep.subr.mxu0 0.0
      %1128 = vmatpush1.msra.mxu0 0.0
      %1129 = vmatprep.subr.mxu0 0.0
      %1130 = vmatpush1.msra.mxu0 0.0
      %1131 = vmatprep.subr.mxu0 0.0
      %1132 = vmatpush1.msra.mxu0 0.0
      %1133 = vmatprep.subr.mxu0 0.0
      %1134 = vmatpush1.msra.mxu0 0.0
      %1135 = vmatprep.subr.mxu0 0.0
      %1136 = vmatpush1.msra.mxu0 0.0
      %1137 = vmatprep.subr.mxu0 0.0
      %1138 = vmatpush1.msra.mxu0 0.0
      %1139 = vmatprep.subr.mxu0 0.0
      %1140 = vmatpush1.msra.mxu0 0.0
      %1141 = vmatprep.subr.mxu0 0.0
      %1142 = vmatpush1.msra.mxu0 0.0
      %1143 = vmatprep.subr.mxu0 0.0
      %1144 = vmatpush1.msra.mxu0 0.0
      %1145 = vmatprep.subr.mxu0 0.0
      %1146 = vmatpush1.msra.mxu0 0.0
      %1147 = vmatprep.subr.mxu0 0.0
      %1148 = vmatpush1.msra.mxu0 0.0
      %1149 = vmatprep.subr.mxu0 0.0
      %1150 = vmatpush1.msra.mxu0 0.0
      %1151 = vmatprep.subr.mxu0 0.0
      %1152 = vmatpush1.msra.mxu0 0.0
      %1153 = vmatprep.subr.mxu0 0.0
      %1154 = vmatpush1.msra.mxu0 0.0
      %1155 = vmatprep.subr.mxu0 0.0
      %1156 = vmatpush1.msra.mxu0 0.0
      %1157 = vmatprep.subr.mxu0 0.0
      %1158 = vmatpush1.msra.mxu0 0.0
      %1159 = vmatprep.subr.mxu0 0.0
      %1160 = vmatpush1.msra.mxu0 0.0
      %1161 = vmatprep.subr.mxu0 0.0
      %1162 = vmatpush1.msra.mxu0 0.0
      %1163 = vmatprep.subr.mxu0 0.0
      %1164 = vmatpush1.msra.mxu0 0.0
      %1165 = vmatprep.subr.mxu0 0.0
      %1166 = vmatpush1.msra.mxu0 0.0
      %1167 = vmatprep.subr.mxu0 0.0
      %1168 = vmatpush1.msra.mxu0 0.0
      %1169 = vmatprep.subr.mxu0 0.0
      %1170 = vmatpush1.msra.mxu0 0.0
      %1171 = vmatprep.subr.mxu0 0.0
      %1172 = vmatpush1.msra.mxu0 0.0
      %1173 = vmatprep.subr.mxu0 0.0
      %1174 = vmatpush1.msra.mxu0 0.0
      %1175 = vmatprep.subr.mxu0 0.0
      %1176 = vmatpush1.msra.mxu0 0.0
      %1177 = vmatprep.mubr.f32.mxu0 0.0
      %1178 = vmatmul.mubr.f32.gmra.mrb[0].mxu0 %v1093
      %v1179 = vpop.f32.mrb[0].mxu0
      %v1180 = vadd.f32 %v1089, %v1179
      %v1181 = vpop.f32.mrb[0].mxu0
      %1182 = vmatprep.mubr.f32.mxu0 0.0
      %1183 = vmatmul.mubr.f32.gmra.mrb[0].mxu0 %v1096
      %v1184 = vpop.f32.mrb[0].mxu0
      %v1185 = vadd.f32 %v1089, %v1184
      %v1186 = vpop.f32.mrb[0].mxu0
      %1187 = vmatprep.mubr.f32.mxu0 0.0
      %1188 = vmatmul.mubr.f32.gmra.mrb[0].mxu0 %v1099
      %v1189 = vpop.f32.mrb[0].mxu0
      %v1190 = vadd.f32 %v1089, %v1189
      %v1191 = vpop.f32.mrb[0].mxu0
      %1192 = vmatprep.mubr.f32.mxu0 0.0
      %1193 = vmatmul.mubr.f32.gmra.mrb[0].mxu0 %v1102
      %v1194 = vpop.f32.mrb[0].mxu0
      %v1195 = vadd.f32 %v1089, %v1194
      %v1196 = vpop.f32.mrb[0].mxu0
      %1197 = vmatprep.mubr.f32.mxu0 0.0
      %1198 = vmatmul.mubr.f32.gmra.mrb[0].mxu0 %v1105
      %v1199 = vpop.f32.mrb[0].mxu0
      %v1200 = vadd.f32 %v1089, %v1199
      %v1201 = vpop.f32.mrb[0].mxu0
      %1202 = vmatprep.mubr.f32.mxu0 0.0
      %1203 = vmatmul.mubr.f32.gmra.mrb[0].mxu0 %v1108
      %v1204 = vpop.f32.mrb[0].mxu0
      %v1205 = vadd.f32 %v1089, %v1204
      %v1206 = vpop.f32.mrb[0].mxu0
      %1207 = vmatprep.mubr.f32.mxu0 0.0
      %1208 = vmatmul.mubr.f32.gmra.mrb[0].mxu0 %v1111
      %v1209 = vpop.f32.mrb[0].mxu0
      %v1210 = vadd.f32 %v1089, %v1209
      %v1211 = vpop.f32.mrb[0].mxu0
      %1212 = vdwg.mxu0
      %v1213 = vmax.f32 %v1180, 0.0
      %v1214 = vmax.f32 %v1185, 0.0
      %v1215 = vmax.f32 %v1190, 0.0
      %v1216 = vmax.f32 %v1195, 0.0
      %v1217 = vmax.f32 %v1200, 0.0
      %v1218 = vmax.f32 %v1205, 0.0
      %v1219 = vmax.f32 %v1210, 0.0
      %1221 = vset.pattern.permute.xlu0 0
      %1222 = vperm.xlu0 %1221, %v453
      %v1223 = vpop.permute.xlu0 %1222
      %1226 = vset.pattern.permute.xlu0 0
      %1227 = vperm.xlu0 %1226, %v454
      %v1228 = vpop.permute.xlu0 %1227
      %1231 = vset.pattern.permute.xlu0 0
      %1232 = vperm.xlu0 %1231, %v455
      %v1233 = vpop.permute.xlu0 %1232
      %1236 = vset.pattern.permute.xlu0 0
      %1237 = vperm.xlu0 %1236, %v456
      %v1238 = vpop.permute.xlu0 %1237
      %1241 = vset.pattern.permute.xlu0 0
      %1242 = vperm.xlu0 %1241, %v457
      %v1243 = vpop.permute.xlu0 %1242
      %1246 = vset.pattern.permute.xlu0 0
      %1247 = vperm.xlu0 %1246, %v458
      %v1248 = vpop.permute.xlu0 %1247
      %1251 = vset.pattern.permute.xlu0 0
      %1252 = vperm.xlu0 %1251, %v459
      %v1253 = vpop.permute.xlu0 %1252
      %v1255 = vmul.f32 %v1213, %v1223
      %v1256 = vmul.f32 %v1214, %v1228
      %v1257 = vmul.f32 %v1215, %v1233
      %v1258 = vmul.f32 %v1216, %v1238
      %v1259 = vmul.f32 %v1217, %v1243
      %v1260 = vmul.f32 %v1218, %v1248
      %v1261 = vmul.f32 %v1219, %v1253
      %v1262 = vmax.f32 %v1255, %v1256
      %v1263 = vmax.f32 %v1262, %v1257
      %v1264 = vmax.f32 %v1263, %v1258
      %v1265 = vmax.f32 %v1264, %v1259
      %v1266 = vmax.f32 %v1265, %v1260
      %v1267 = vmax.f32 %v1266, %v1261
      %v1268 = vrot.slane %v467, 2
      %v1269 = vsel %vm577, %v1268, 0
      %1271 = vmatprep.subr.mxu0 0.0
      %1272 = vmatpush1.msra.mxu0 %v1269
      %1273 = vmatprep.subr.mxu0 0.0
      %1274 = vmatpush1.msra.mxu0 0.0
      %1275 = vmatprep.subr.mxu0 0.0
      %1276 = vmatpush1.msra.mxu0 0.0
      %1277 = vmatprep.subr.mxu0 0.0
      %1278 = vmatpush1.msra.mxu0 0.0
      %1279 = vmatprep.subr.mxu0 0.0
      %1280 = vmatpush1.msra.mxu0 0.0
      %1281 = vmatprep.subr.mxu0 0.0
      %1282 = vmatpush1.msra.mxu0 0.0
      %1283 = vmatprep.subr.mxu0 0.0
      %1284 = vmatpush1.msra.mxu0 0.0
      %1285 = vmatprep.subr.mxu0 0.0
      %1286 = vmatpush1.msra.mxu0 0.0
      %1287 = vmatprep.subr.mxu0 0.0
      %1288 = vmatpush1.msra.mxu0 0.0
      %1289 = vmatprep.subr.mxu0 0.0
      %1290 = vmatpush1.msra.mxu0 0.0
      %1291 = vmatprep.subr.mxu0 0.0
      %1292 = vmatpush1.msra.mxu0 0.0
      %1293 = vmatprep.subr.mxu0 0.0
      %1294 = vmatpush1.msra.mxu0 0.0
      %1295 = vmatprep.subr.mxu0 0.0
      %1296 = vmatpush1.msra.mxu0 0.0
      %1297 = vmatprep.subr.mxu0 0.0
      %1298 = vmatpush1.msra.mxu0 0.0
      %1299 = vmatprep.subr.mxu0 0.0
      %1300 = vmatpush1.msra.mxu0 0.0
      %1301 = vmatprep.subr.mxu0 0.0
      %1302 = vmatpush1.msra.mxu0 0.0
      %1303 = vmatprep.subr.mxu0 0.0
      %1304 = vmatpush1.msra.mxu0 0.0
      %1305 = vmatprep.subr.mxu0 0.0
      %1306 = vmatpush1.msra.mxu0 0.0
      %1307 = vmatprep.subr.mxu0 0.0
      %1308 = vmatpush1.msra.mxu0 0.0
      %1309 = vmatprep.subr.mxu0 0.0
      %1310 = vmatpush1.msra.mxu0 0.0
      %1311 = vmatprep.subr.mxu0 0.0
      %1312 = vmatpush1.msra.mxu0 0.0
      %1313 = vmatprep.subr.mxu0 0.0
      %1314 = vmatpush1.msra.mxu0 0.0
      %1315 = vmatprep.subr.mxu0 0.0
      %1316 = vmatpush1.msra.mxu0 0.0
      %1317 = vmatprep.subr.mxu0 0.0
      %1318 = vmatpush1.msra.mxu0 0.0
      %1319 = vmatprep.subr.mxu0 0.0
      %1320 = vmatpush1.msra.mxu0 0.0
      %1321 = vmatprep.subr.mxu0 0.0
      %1322 = vmatpush1.msra.mxu0 0.0
      %1323 = vmatprep.subr.mxu0 0.0
      %1324 = vmatpush1.msra.mxu0 0.0
      %1325 = vmatprep.subr.mxu0 0.0
      %1326 = vmatpush1.msra.mxu0 0.0
      %1327 = vmatprep.subr.mxu0 0.0
      %1328 = vmatpush1.msra.mxu0 0.0
      %1329 = vmatprep.subr.mxu0 0.0
      %1330 = vmatpush1.msra.mxu0 0.0
      %1331 = vmatprep.subr.mxu0 0.0
      %1332 = vmatpush1.msra.mxu0 0.0
      %1333 = vmatprep.subr.mxu0 0.0
      %1334 = vmatpush1.msra.mxu0 0.0
      %1335 = vmatprep.mubr.f32.mxu0 0.0
      %1336 = vmatmul.mubr.f32.gmra.mrb[0].mxu0 %v897
      %v1337 = vpop.f32.mrb[0].mxu0
      %v1338 = vadd.f32 0.0, %v1337
      %v1339 = vpop.f32.mrb[0].mxu0
      %1340 = vdwg.mxu0
      %v1341 = vadd.f32 %v891, %v1338
      %vm1346 = vcmask 1044480
      %v1347 = vrot.slane %v467, 3
      %v1348 = vrot.slane %v468, 3
      %v1349 = vsel %vm1346, %v1347, %v1348
      %v1350 = vrot.slane %v469, 3
      %v1351 = vsel %vm1346, %v1348, %v1350
      %v1352 = vrot.slane %v470, 3
      %v1353 = vsel %vm1346, %v1350, %v1352
      %v1354 = vrot.slane %v471, 3
      %v1355 = vsel %vm1346, %v1352, %v1354
      %v1361 = vsel %vm1091, %v1267, 0
      %1363 = vmatprep.subr.mxu0 0.0
      %1364 = vmatpush1.msra.mxu0 %v1349
      %1365 = vmatprep.subr.mxu0 0.0
      %1366 = vmatpush1.msra.mxu0 %v1351
      %1367 = vmatprep.subr.mxu0 0.0
      %1368 = vmatpush1.msra.mxu0 %v1353
      %1369 = vmatprep.subr.mxu0 0.0
      %1370 = vmatpush1.msra.mxu0 %v1355
      %1371 = vmatprep.subr.mxu0 0.0
      %1372 = vmatpush1.msra.mxu0 0.0
      %1373 = vmatprep.subr.mxu0 0.0
      %1374 = vmatpush1.msra.mxu0 0.0
      %1375 = vmatprep.subr.mxu0 0.0
      %1376 = vmatpush1.msra.mxu0 0.0
      %1377 = vmatprep.subr.mxu0 0.0
      %1378 = vmatpush1.msra.mxu0 0.0
      %1379 = vmatprep.subr.mxu0 0.0
      %1380 = vmatpush1.msra.mxu0 0.0
      %1381 = vmatprep.subr.mxu0 0.0
      %1382 = vmatpush1.msra.mxu0 0.0
      %1383 = vmatprep.subr.mxu0 0.0
      %1384 = vmatpush1.msra.mxu0 0.0
      %1385 = vmatprep.subr.mxu0 0.0
      %1386 = vmatpush1.msra.mxu0 0.0
      %1387 = vmatprep.subr.mxu0 0.0
      %1388 = vmatpush1.msra.mxu0 0.0
      %1389 = vmatprep.subr.mxu0 0.0
      %1390 = vmatpush1.msra.mxu0 0.0
      %1391 = vmatprep.subr.mxu0 0.0
      %1392 = vmatpush1.msra.mxu0 0.0
      %1393 = vmatprep.subr.mxu0 0.0
      %1394 = vmatpush1.msra.mxu0 0.0
      %1395 = vmatprep.subr.mxu0 0.0
      %1396 = vmatpush1.msra.mxu0 0.0
      %1397 = vmatprep.subr.mxu0 0.0
      %1398 = vmatpush1.msra.mxu0 0.0
      %1399 = vmatprep.subr.mxu0 0.0
      %1400 = vmatpush1.msra.mxu0 0.0
      %1401 = vmatprep.subr.mxu0 0.0
      %1402 = vmatpush1.msra.mxu0 0.0
      %1403 = vmatprep.subr.mxu0 0.0
      %1404 = vmatpush1.msra.mxu0 0.0
      %1405 = vmatprep.subr.mxu0 0.0
      %1406 = vmatpush1.msra.mxu0 0.0
      %1407 = vmatprep.subr.mxu0 0.0
      %1408 = vmatpush1.msra.mxu0 0.0
      %1409 = vmatprep.subr.mxu0 0.0
      %1410 = vmatpush1.msra.mxu0 0.0
      %1411 = vmatprep.subr.mxu0 0.0
      %1412 = vmatpush1.msra.mxu0 0.0
      %1413 = vmatprep.subr.mxu0 0.0
      %1414 = vmatpush1.msra.mxu0 0.0
      %1415 = vmatprep.subr.mxu0 0.0
      %1416 = vmatpush1.msra.mxu0 0.0
      %1417 = vmatprep.subr.mxu0 0.0
      %1418 = vmatpush1.msra.mxu0 0.0
      %1419 = vmatprep.subr.mxu0 0.0
      %1420 = vmatpush1.msra.mxu0 0.0
      %1421 = vmatprep.subr.mxu0 0.0
      %1422 = vmatpush1.msra.mxu0 0.0
      %1423 = vmatprep.subr.mxu0 0.0
      %1424 = vmatpush1.msra.mxu0 0.0
      %1425 = vmatprep.subr.mxu0 0.0
      %1426 = vmatpush1.msra.mxu0 0.0
      %1427 = vmatprep.mubr.f32.mxu0 0.0
      %1428 = vmatmul.mubr.f32.gmra.mrb[0].mxu0 %v1361
      %v1429 = vpop.f32.mrb[0].mxu0
      %v1430 = vadd.f32 0.0, %v1429
      %v1431 = vpop.f32.mrb[0].mxu0
      %1432 = vdwg.mxu0
      %v1433 = vadd.f32 %v1341, %v1430
      %v1434 = vmax.f32 %v1433, 0.0
      %v1436 = vlaneseq
      %v1437 = vshrl.u32 %v1436, 7
      %v1438 = vsub.s32 0, %v1437
      %v1439 = vrot.slane %v475, %v1438
      %vm1441 = vcmask 130048
      %v1443 = vsel %vm1441, %v1434, 0
      %1445 = vmatprep.subr.mxu0 0.0
      %1446 = vmatpush1.msra.mxu0 %v473
      %1447 = vmatprep.subr.mxu0 0.0
      %1448 = vmatpush1.msra.mxu0 %v474
      %1449 = vmatprep.subr.mxu0 0.0
      %1450 = vmatpush1.msra.mxu0 0.0
      %1451 = vmatprep.subr.mxu0 0.0
      %1452 = vmatpush1.msra.mxu0 0.0
      %1453 = vmatprep.subr.mxu0 0.0
      %1454 = vmatpush1.msra.mxu0 0.0
      %1455 = vmatprep.subr.mxu0 0.0
      %1456 = vmatpush1.msra.mxu0 0.0
      %1457 = vmatprep.subr.mxu0 0.0
      %1458 = vmatpush1.msra.mxu0 0.0
      %1459 = vmatprep.subr.mxu0 0.0
      %1460 = vmatpush1.msra.mxu0 0.0
      %1461 = vmatprep.subr.mxu0 0.0
      %1462 = vmatpush1.msra.mxu0 0.0
      %1463 = vmatprep.subr.mxu0 0.0
      %1464 = vmatpush1.msra.mxu0 0.0
      %1465 = vmatprep.subr.mxu0 0.0
      %1466 = vmatpush1.msra.mxu0 0.0
      %1467 = vmatprep.subr.mxu0 0.0
      %1468 = vmatpush1.msra.mxu0 0.0
      %1469 = vmatprep.subr.mxu0 0.0
      %1470 = vmatpush1.msra.mxu0 0.0
      %1471 = vmatprep.subr.mxu0 0.0
      %1472 = vmatpush1.msra.mxu0 0.0
      %1473 = vmatprep.subr.mxu0 0.0
      %1474 = vmatpush1.msra.mxu0 0.0
      %1475 = vmatprep.subr.mxu0 0.0
      %1476 = vmatpush1.msra.mxu0 0.0
      %1477 = vmatprep.subr.mxu0 0.0
      %1478 = vmatpush1.msra.mxu0 0.0
      %1479 = vmatprep.subr.mxu0 0.0
      %1480 = vmatpush1.msra.mxu0 0.0
      %1481 = vmatprep.subr.mxu0 0.0
      %1482 = vmatpush1.msra.mxu0 0.0
      %1483 = vmatprep.subr.mxu0 0.0
      %1484 = vmatpush1.msra.mxu0 0.0
      %1485 = vmatprep.subr.mxu0 0.0
      %1486 = vmatpush1.msra.mxu0 0.0
      %1487 = vmatprep.subr.mxu0 0.0
      %1488 = vmatpush1.msra.mxu0 0.0
      %1489 = vmatprep.subr.mxu0 0.0
      %1490 = vmatpush1.msra.mxu0 0.0
      %1491 = vmatprep.subr.mxu0 0.0
      %1492 = vmatpush1.msra.mxu0 0.0
      %1493 = vmatprep.subr.mxu0 0.0
      %1494 = vmatpush1.msra.mxu0 0.0
      %1495 = vmatprep.subr.mxu0 0.0
      %1496 = vmatpush1.msra.mxu0 0.0
      %1497 = vmatprep.subr.mxu0 0.0
      %1498 = vmatpush1.msra.mxu0 0.0
      %1499 = vmatprep.subr.mxu0 0.0
      %1500 = vmatpush1.msra.mxu0 0.0
      %1501 = vmatprep.subr.mxu0 0.0
      %1502 = vmatpush1.msra.mxu0 0.0
      %1503 = vmatprep.subr.mxu0 0.0
      %1504 = vmatpush1.msra.mxu0 0.0
      %1505 = vmatprep.subr.mxu0 0.0
      %1506 = vmatpush1.msra.mxu0 0.0
      %1507 = vmatprep.subr.mxu0 0.0
      %1508 = vmatpush1.msra.mxu0 0.0
      %1509 = vmatprep.mubr.f32.mxu0 0.0
      %1510 = vmatmul.mubr.f32.gmra.mrb[0].mxu0 %v1443
      %v1511 = vpop.f32.mrb[0].mxu0
      %v1512 = vadd.f32 %v1439, %v1511
      %v1513 = vpop.f32.mrb[0].mxu0
      %1514 = vdwg.mxu0
      %v1515 = vxor.u32 %v1512, 2147483648
      %v1516 = vmul.f32 %v1515, 1.442695
      %v1517 = vpow.pop %v1516
      %v1518 = vadd.f32 %v1517, 1.0
      %v1519 = vrcp.pop %v1518
      %v1520 = vmul.f32 1.0, %v1519
      %v1522 = vsel %vm555, %v1520, 0
      %1524 = vmatprep.subr.mxu0 0.0
      %1525 = vmatpush1.msra.mxu0 %v899
      %1526 = vmatprep.subr.mxu0 0.0
      %1527 = vmatpush1.msra.mxu0 0.0
      %1528 = vmatprep.subr.mxu0 0.0
      %1529 = vmatpush1.msra.mxu0 0.0
      %1530 = vmatprep.subr.mxu0 0.0
      %1531 = vmatpush1.msra.mxu0 0.0
      %1532 = vmatprep.subr.mxu0 0.0
      %1533 = vmatpush1.msra.mxu0 0.0
      %1534 = vmatprep.subr.mxu0 0.0
      %1535 = vmatpush1.msra.mxu0 0.0
      %1536 = vmatprep.subr.mxu0 0.0
      %1537 = vmatpush1.msra.mxu0 0.0
      %1538 = vmatprep.subr.mxu0 0.0
      %1539 = vmatpush1.msra.mxu0 0.0
      %1540 = vmatprep.subr.mxu0 0.0
      %1541 = vmatpush1.msra.mxu0 0.0
      %1542 = vmatprep.subr.mxu0 0.0
      %1543 = vmatpush1.msra.mxu0 0.0
      %1544 = vmatprep.subr.mxu0 0.0
      %1545 = vmatpush1.msra.mxu0 0.0
      %1546 = vmatprep.subr.mxu0 0.0
      %1547 = vmatpush1.msra.mxu0 0.0
      %1548 = vmatprep.subr.mxu0 0.0
      %1549 = vmatpush1.msra.mxu0 0.0
      %1550 = vmatprep.subr.mxu0 0.0
      %1551 = vmatpush1.msra.mxu0 0.0
      %1552 = vmatprep.subr.mxu0 0.0
      %1553 = vmatpush1.msra.mxu0 0.0
      %1554 = vmatprep.subr.mxu0 0.0
      %1555 = vmatpush1.msra.mxu0 0.0
      %1556 = vmatprep.subr.mxu0 0.0
      %1557 = vmatpush1.msra.mxu0 0.0
      %1558 = vmatprep.subr.mxu0 0.0
      %1559 = vmatpush1.msra.mxu0 0.0
      %1560 = vmatprep.subr.mxu0 0.0
      %1561 = vmatpush1.msra.mxu0 0.0
      %1562 = vmatprep.subr.mxu0 0.0
      %1563 = vmatpush1.msra.mxu0 0.0
      %1564 = vmatprep.subr.mxu0 0.0
      %1565 = vmatpush1.msra.mxu0 0.0
      %1566 = vmatprep.subr.mxu0 0.0
      %1567 = vmatpush1.msra.mxu0 0.0
      %1568 = vmatprep.subr.mxu0 0.0
      %1569 = vmatpush1.msra.mxu0 0.0
      %1570 = vmatprep.subr.mxu0 0.0
      %1571 = vmatpush1.msra.mxu0 0.0
      %1572 = vmatprep.subr.mxu0 0.0
      %1573 = vmatpush1.msra.mxu0 0.0
      %1574 = vmatprep.subr.mxu0 0.0
      %1575 = vmatpush1.msra.mxu0 0.0
      %1576 = vmatprep.subr.mxu0 0.0
      %1577 = vmatpush1.msra.mxu0 0.0
      %1578 = vmatprep.subr.mxu0 0.0
      %1579 = vmatpush1.msra.mxu0 0.0
      %1580 = vmatprep.subr.mxu0 0.0
      %1581 = vmatpush1.msra.mxu0 0.0
      %1582 = vmatprep.subr.mxu0 0.0
      %1583 = vmatpush1.msra.mxu0 0.0
      %1584 = vmatprep.subr.mxu0 0.0
      %1585 = vmatpush1.msra.mxu0 0.0
      %1586 = vmatprep.subr.mxu0 0.0
      %1587 = vmatpush1.msra.mxu0 0.0
      %1588 = vmatprep.mubr.f32.mxu0 0.0
      %1589 = vmatmul.mubr.f32.gmra.mrb[0].mxu0 %v1522
      %v1590 = vpop.f32.mrb[0].mxu0
      %v1591 = vadd.f32 0.0, %v1590
      %v1592 = vpop.f32.mrb[0].mxu0
      %1593 = vdwg.mxu0
      %1594 = vmatprep.subr.mxu0 0.0
      %1595 = vmatpush1.msra.mxu0 %v1591
      %1596 = vmatprep.subr.mxu0 0.0
      %1597 = vmatpush1.msra.mxu0 0.0
      %1598 = vmatprep.subr.mxu0 0.0
      %1599 = vmatpush1.msra.mxu0 0.0
      %1600 = vmatprep.subr.mxu0 0.0
      %1601 = vmatpush1.msra.mxu0 0.0
      %1602 = vmatprep.subr.mxu0 0.0
      %1603 = vmatpush1.msra.mxu0 0.0
      %1604 = vmatprep.subr.mxu0 0.0
      %1605 = vmatpush1.msra.mxu0 0.0
      %1606 = vmatprep.subr.mxu0 0.0
      %1607 = vmatpush1.msra.mxu0 0.0
      %1608 = vmatprep.subr.mxu0 0.0
      %1609 = vmatpush1.msra.mxu0 0.0
      %1610 = vmatprep.subr.mxu0 0.0
      %1611 = vmatpush1.msra.mxu0 0.0
      %1612 = vmatprep.subr.mxu0 0.0
      %1613 = vmatpush1.msra.mxu0 0.0
      %1614 = vmatprep.subr.mxu0 0.0
      %1615 = vmatpush1.msra.mxu0 0.0
      %1616 = vmatprep.subr.mxu0 0.0
      %1617 = vmatpush1.msra.mxu0 0.0
      %1618 = vmatprep.subr.mxu0 0.0
      %1619 = vmatpush1.msra.mxu0 0.0
      %1620 = vmatprep.subr.mxu0 0.0
      %1621 = vmatpush1.msra.mxu0 0.0
      %1622 = vmatprep.subr.mxu0 0.0
      %1623 = vmatpush1.msra.mxu0 0.0
      %1624 = vmatprep.subr.mxu0 0.0
      %1625 = vmatpush1.msra.mxu0 0.0
      %1626 = vmatprep.subr.mxu0 0.0
      %1627 = vmatpush1.msra.mxu0 0.0
      %1628 = vmatprep.subr.mxu0 0.0
      %1629 = vmatpush1.msra.mxu0 0.0
      %1630 = vmatprep.subr.mxu0 0.0
      %1631 = vmatpush1.msra.mxu0 0.0
      %1632 = vmatprep.subr.mxu0 0.0
      %1633 = vmatpush1.msra.mxu0 0.0
      %1634 = vmatprep.subr.mxu0 0.0
      %1635 = vmatpush1.msra.mxu0 0.0
      %1636 = vmatprep.subr.mxu0 0.0
      %1637 = vmatpush1.msra.mxu0 0.0
      %1638 = vmatprep.subr.mxu0 0.0
      %1639 = vmatpush1.msra.mxu0 0.0
      %1640 = vmatprep.subr.mxu0 0.0
      %1641 = vmatpush1.msra.mxu0 0.0
      %1642 = vmatprep.subr.mxu0 0.0
      %1643 = vmatpush1.msra.mxu0 0.0
      %1644 = vmatprep.subr.mxu0 0.0
      %1645 = vmatpush1.msra.mxu0 0.0
      %1646 = vmatprep.subr.mxu0 0.0
      %1647 = vmatpush1.msra.mxu0 0.0
      %1648 = vmatprep.subr.mxu0 0.0
      %1649 = vmatpush1.msra.mxu0 0.0
      %1650 = vmatprep.subr.mxu0 0.0
      %1651 = vmatpush1.msra.mxu0 0.0
      %1652 = vmatprep.subr.mxu0 0.0
      %1653 = vmatpush1.msra.mxu0 0.0
      %1654 = vmatprep.subr.mxu0 0.0
      %1655 = vmatpush1.msra.mxu0 0.0
      %1656 = vmatprep.subr.mxu0 0.0
      %1657 = vmatpush1.msra.mxu0 0.0
      %1658 = vmatprep.mubr.f32.mxu0 0.0
      %1659 = vmatmul.mubr.f32.gmra.mrb[0].mxu0 %v682
      %v1660 = vpop.f32.mrb[0].mxu0
      %v1661 = vadd.f32 0.0, %v1660
      %v1662 = vpop.f32.mrb[0].mxu0
      %1663 = vmatprep.mubr.f32.mxu0 0.0
      %1664 = vmatmul.mubr.f32.gmra.mrb[0].mxu0 %v685
      %v1665 = vpop.f32.mrb[0].mxu0
      %v1666 = vadd.f32 0.0, %v1665
      %v1667 = vpop.f32.mrb[0].mxu0
      %1668 = vmatprep.mubr.f32.mxu0 0.0
      %1669 = vmatmul.mubr.f32.gmra.mrb[0].mxu0 %v688
      %v1670 = vpop.f32.mrb[0].mxu0
      %v1671 = vadd.f32 0.0, %v1670
      %v1672 = vpop.f32.mrb[0].mxu0
      %1673 = vmatprep.mubr.f32.mxu0 0.0
      %1674 = vmatmul.mubr.f32.gmra.mrb[0].mxu0 %v691
      %v1675 = vpop.f32.mrb[0].mxu0
      %v1676 = vadd.f32 0.0, %v1675
      %v1677 = vpop.f32.mrb[0].mxu0
      %1678 = vmatprep.mubr.f32.mxu0 0.0
      %1679 = vmatmul.mubr.f32.gmra.mrb[0].mxu0 %v694
      %v1680 = vpop.f32.mrb[0].mxu0
      %v1681 = vadd.f32 0.0, %v1680
      %v1682 = vpop.f32.mrb[0].mxu0
      %1683 = vmatprep.mubr.f32.mxu0 0.0
      %1684 = vmatmul.mubr.f32.gmra.mrb[0].mxu0 %v697
      %v1685 = vpop.f32.mrb[0].mxu0
      %v1686 = vadd.f32 0.0, %v1685
      %v1687 = vpop.f32.mrb[0].mxu0
      %1688 = vmatprep.mubr.f32.mxu0 0.0
      %1689 = vmatmul.mubr.f32.gmra.mrb[0].mxu0 %v700
      %v1690 = vpop.f32.mrb[0].mxu0
      %v1691 = vadd.f32 0.0, %v1690
      %v1692 = vpop.f32.mrb[0].mxu0
      %1693 = vdwg.mxu0
      %v1694 = vadd.f32 %v808, %v1661
      %v1695 = vadd.f32 %v809, %v1666
      %v1696 = vadd.f32 %v810, %v1671
      %v1697 = vadd.f32 %v811, %v1676
      %v1698 = vadd.f32 %v812, %v1681
      %v1699 = vadd.f32 %v813, %v1686
      %v1700 = vadd.f32 %v814, %v1691
      %v1701 = vmax.f32 %v1694, 0.0
      %v1702 = vmax.f32 %v1695, 0.0
      %v1703 = vmax.f32 %v1696, 0.0
      %v1704 = vmax.f32 %v1697, 0.0
      %v1705 = vmax.f32 %v1698, 0.0
      %v1706 = vmax.f32 %v1699, 0.0
      %v1707 = vmax.f32 %v1700, 0.0
      %v1709 = vsel %vm1091, %v1701, 0
      %v1712 = vsel %vm1091, %v1702, 0
      %v1715 = vsel %vm1091, %v1703, 0
      %v1718 = vsel %vm1091, %v1704, 0
      %v1721 = vsel %vm1091, %v1705, 0
      %v1724 = vsel %vm1091, %v1706, 0
      %v1727 = vsel %vm1091, %v1707, 0
      %1729 = vmatprep.subr.mxu0 0.0
      %1730 = vmatpush1.msra.mxu0 %v462
      %1731 = vmatprep.subr.mxu0 0.0
      %1732 = vmatpush1.msra.mxu0 %v463
      %1733 = vmatprep.subr.mxu0 0.0
      %1734 = vmatpush1.msra.mxu0 %v464
      %1735 = vmatprep.subr.mxu0 0.0
      %1736 = vmatpush1.msra.mxu0 %v465
      %1737 = vmatprep.subr.mxu0 0.0
      %1738 = vmatpush1.msra.mxu0 0.0
      %1739 = vmatprep.subr.mxu0 0.0
      %1740 = vmatpush1.msra.mxu0 0.0
      %1741 = vmatprep.subr.mxu0 0.0
      %1742 = vmatpush1.msra.mxu0 0.0
      %1743 = vmatprep.subr.mxu0 0.0
      %1744 = vmatpush1.msra.mxu0 0.0
      %1745 = vmatprep.subr.mxu0 0.0
      %1746 = vmatpush1.msra.mxu0 0.0
      %1747 = vmatprep.subr.mxu0 0.0
      %1748 = vmatpush1.msra.mxu0 0.0
      %1749 = vmatprep.subr.mxu0 0.0
      %1750 = vmatpush1.msra.mxu0 0.0
      %1751 = vmatprep.subr.mxu0 0.0
      %1752 = vmatpush1.msra.mxu0 0.0
      %1753 = vmatprep.subr.mxu0 0.0
      %1754 = vmatpush1.msra.mxu0 0.0
      %1755 = vmatprep.subr.mxu0 0.0
      %1756 = vmatpush1.msra.mxu0 0.0
      %1757 = vmatprep.subr.mxu0 0.0
      %1758 = vmatpush1.msra.mxu0 0.0
      %1759 = vmatprep.subr.mxu0 0.0
      %1760 = vmatpush1.msra.mxu0 0.0
      %1761 = vmatprep.subr.mxu0 0.0
      %1762 = vmatpush1.msra.mxu0 0.0
      %1763 = vmatprep.subr.mxu0 0.0
      %1764 = vmatpush1.msra.mxu0 0.0
      %1765 = vmatprep.subr.mxu0 0.0
      %1766 = vmatpush1.msra.mxu0 0.0
      %1767 = vmatprep.subr.mxu0 0.0
      %1768 = vmatpush1.msra.mxu0 0.0
      %1769 = vmatprep.subr.mxu0 0.0
      %1770 = vmatpush1.msra.mxu0 0.0
      %1771 = vmatprep.subr.mxu0 0.0
      %1772 = vmatpush1.msra.mxu0 0.0
      %1773 = vmatprep.subr.mxu0 0.0
      %1774 = vmatpush1.msra.mxu0 0.0
      %1775 = vmatprep.subr.mxu0 0.0
      %1776 = vmatpush1.msra.mxu0 0.0
      %1777 = vmatprep.subr.mxu0 0.0
      %1778 = vmatpush1.msra.mxu0 0.0
      %1779 = vmatprep.subr.mxu0 0.0
      %1780 = vmatpush1.msra.mxu0 0.0
      %1781 = vmatprep.subr.mxu0 0.0
      %1782 = vmatpush1.msra.mxu0 0.0
      %1783 = vmatprep.subr.mxu0 0.0
      %1784 = vmatpush1.msra.mxu0 0.0
      %1785 = vmatprep.subr.mxu0 0.0
      %1786 = vmatpush1.msra.mxu0 0.0
      %1787 = vmatprep.subr.mxu0 0.0
      %1788 = vmatpush1.msra.mxu0 0.0
      %1789 = vmatprep.subr.mxu0 0.0
      %1790 = vmatpush1.msra.mxu0 0.0
      %1791 = vmatprep.subr.mxu0 0.0
      %1792 = vmatpush1.msra.mxu0 0.0
      %1793 = vmatprep.mubr.f32.mxu0 0.0
      %1794 = vmatmul.mubr.f32.gmra.mrb[0].mxu0 %v1709
      %v1795 = vpop.f32.mrb[0].mxu0
      %v1796 = vadd.f32 %v1089, %v1795
      %v1797 = vpop.f32.mrb[0].mxu0
      %1798 = vmatprep.mubr.f32.mxu0 0.0
      %1799 = vmatmul.mubr.f32.gmra.mrb[0].mxu0 %v1712
      %v1800 = vpop.f32.mrb[0].mxu0
      %v1801 = vadd.f32 %v1089, %v1800
      %v1802 = vpop.f32.mrb[0].mxu0
      %1803 = vmatprep.mubr.f32.mxu0 0.0
      %1804 = vmatmul.mubr.f32.gmra.mrb[0].mxu0 %v1715
      %v1805 = vpop.f32.mrb[0].mxu0
      %v1806 = vadd.f32 %v1089, %v1805
      %v1807 = vpop.f32.mrb[0].mxu0
      %1808 = vmatprep.mubr.f32.mxu0 0.0
      %1809 = vmatmul.mubr.f32.gmra.mrb[0].mxu0 %v1718
      %v1810 = vpop.f32.mrb[0].mxu0
      %v1811 = vadd.f32 %v1089, %v1810
      %v1812 = vpop.f32.mrb[0].mxu0
      %1813 = vmatprep.mubr.f32.mxu0 0.0
      %1814 = vmatmul.mubr.f32.gmra.mrb[0].mxu0 %v1721
      %v1815 = vpop.f32.mrb[0].mxu0
      %v1816 = vadd.f32 %v1089, %v1815
      %v1817 = vpop.f32.mrb[0].mxu0
      %1818 = vmatprep.mubr.f32.mxu0 0.0
      %1819 = vmatmul.mubr.f32.gmra.mrb[0].mxu0 %v1724
      %v1820 = vpop.f32.mrb[0].mxu0
      %v1821 = vadd.f32 %v1089, %v1820
      %v1822 = vpop.f32.mrb[0].mxu0
      %1823 = vmatprep.mubr.f32.mxu0 0.0
      %1824 = vmatmul.mubr.f32.gmra.mrb[0].mxu0 %v1727
      %v1825 = vpop.f32.mrb[0].mxu0
      %v1826 = vadd.f32 %v1089, %v1825
      %v1827 = vpop.f32.mrb[0].mxu0
      %1828 = vdwg.mxu0
      %v1829 = vmax.f32 %v1796, 0.0
      %v1830 = vmax.f32 %v1801, 0.0
      %v1831 = vmax.f32 %v1806, 0.0
      %v1832 = vmax.f32 %v1811, 0.0
      %v1833 = vmax.f32 %v1816, 0.0
      %v1834 = vmax.f32 %v1821, 0.0
      %v1835 = vmax.f32 %v1826, 0.0
      %v1836 = vmul.f32 %v1829, %v1223
      %v1837 = vmul.f32 %v1830, %v1228
      %v1838 = vmul.f32 %v1831, %v1233
      %v1839 = vmul.f32 %v1832, %v1238
      %v1840 = vmul.f32 %v1833, %v1243
      %v1841 = vmul.f32 %v1834, %v1248
      %v1842 = vmul.f32 %v1835, %v1253
      %v1843 = vmax.f32 %v1836, %v1837
      %v1844 = vmax.f32 %v1843, %v1838
      %v1845 = vmax.f32 %v1844, %v1839
      %v1846 = vmax.f32 %v1845, %v1840
      %v1847 = vmax.f32 %v1846, %v1841
      %v1848 = vmax.f32 %v1847, %v1842
      %1849 = vmatprep.subr.mxu0 0.0
      %1850 = vmatpush1.msra.mxu0 %v1269
      %1851 = vmatprep.subr.mxu0 0.0
      %1852 = vmatpush1.msra.mxu0 0.0
      %1853 = vmatprep.subr.mxu0 0.0
      %1854 = vmatpush1.msra.mxu0 0.0
      %1855 = vmatprep.subr.mxu0 0.0
      %1856 = vmatpush1.msra.mxu0 0.0
      %1857 = vmatprep.subr.mxu0 0.0
      %1858 = vmatpush1.msra.mxu0 0.0
      %1859 = vmatprep.subr.mxu0 0.0
      %1860 = vmatpush1.msra.mxu0 0.0
      %1861 = vmatprep.subr.mxu0 0.0
      %1862 = vmatpush1.msra.mxu0 0.0
      %1863 = vmatprep.subr.mxu0 0.0
      %1864 = vmatpush1.msra.mxu0 0.0
      %1865 = vmatprep.subr.mxu0 0.0
      %1866 = vmatpush1.msra.mxu0 0.0
      %1867 = vmatprep.subr.mxu0 0.0
      %1868 = vmatpush1.msra.mxu0 0.0
      %1869 = vmatprep.subr.mxu0 0.0
      %1870 = vmatpush1.msra.mxu0 0.0
      %1871 = vmatprep.subr.mxu0 0.0
      %1872 = vmatpush1.msra.mxu0 0.0
      %1873 = vmatprep.subr.mxu0 0.0
      %1874 = vmatpush1.msra.mxu0 0.0
      %1875 = vmatprep.subr.mxu0 0.0
      %1876 = vmatpush1.msra.mxu0 0.0
      %1877 = vmatprep.subr.mxu0 0.0
      %1878 = vmatpush1.msra.mxu0 0.0
      %1879 = vmatprep.subr.mxu0 0.0
      %1880 = vmatpush1.msra.mxu0 0.0
      %1881 = vmatprep.subr.mxu0 0.0
      %1882 = vmatpush1.msra.mxu0 0.0
      %1883 = vmatprep.subr.mxu0 0.0
      %1884 = vmatpush1.msra.mxu0 0.0
      %1885 = vmatprep.subr.mxu0 0.0
      %1886 = vmatpush1.msra.mxu0 0.0
      %1887 = vmatprep.subr.mxu0 0.0
      %1888 = vmatpush1.msra.mxu0 0.0
      %1889 = vmatprep.subr.mxu0 0.0
      %1890 = vmatpush1.msra.mxu0 0.0
      %1891 = vmatprep.subr.mxu0 0.0
      %1892 = vmatpush1.msra.mxu0 0.0
      %1893 = vmatprep.subr.mxu0 0.0
      %1894 = vmatpush1.msra.mxu0 0.0
      %1895 = vmatprep.subr.mxu0 0.0
      %1896 = vmatpush1.msra.mxu0 0.0
      %1897 = vmatprep.subr.mxu0 0.0
      %1898 = vmatpush1.msra.mxu0 0.0
      %1899 = vmatprep.subr.mxu0 0.0
      %1900 = vmatpush1.msra.mxu0 0.0
      %1901 = vmatprep.subr.mxu0 0.0
      %1902 = vmatpush1.msra.mxu0 0.0
      %1903 = vmatprep.subr.mxu0 0.0
      %1904 = vmatpush1.msra.mxu0 0.0
      %1905 = vmatprep.subr.mxu0 0.0
      %1906 = vmatpush1.msra.mxu0 0.0
      %1907 = vmatprep.subr.mxu0 0.0
      %1908 = vmatpush1.msra.mxu0 0.0
      %1909 = vmatprep.subr.mxu0 0.0
      %1910 = vmatpush1.msra.mxu0 0.0
      %1911 = vmatprep.subr.mxu0 0.0
      %1912 = vmatpush1.msra.mxu0 0.0
      %1913 = vmatprep.mubr.f32.mxu0 0.0
      %1914 = vmatmul.mubr.f32.gmra.mrb[0].mxu0 %v1522
      %v1915 = vpop.f32.mrb[0].mxu0
      %v1916 = vadd.f32 0.0, %v1915
      %v1917 = vpop.f32.mrb[0].mxu0
      %1918 = vdwg.mxu0
      %v1919 = vadd.f32 %v891, %v1916
      %v1921 = vsel %vm1091, %v1848, 0
      %1923 = vmatprep.subr.mxu0 0.0
      %1924 = vmatpush1.msra.mxu0 %v1349
      %1925 = vmatprep.subr.mxu0 0.0
      %1926 = vmatpush1.msra.mxu0 %v1351
      %1927 = vmatprep.subr.mxu0 0.0
      %1928 = vmatpush1.msra.mxu0 %v1353
      %1929 = vmatprep.subr.mxu0 0.0
      %1930 = vmatpush1.msra.mxu0 %v1355
      %1931 = vmatprep.subr.mxu0 0.0
      %1932 = vmatpush1.msra.mxu0 0.0
      %1933 = vmatprep.subr.mxu0 0.0
      %1934 = vmatpush1.msra.mxu0 0.0
      %1935 = vmatprep.subr.mxu0 0.0
      %1936 = vmatpush1.msra.mxu0 0.0
      %1937 = vmatprep.subr.mxu0 0.0
      %1938 = vmatpush1.msra.mxu0 0.0
      %1939 = vmatprep.subr.mxu0 0.0
      %1940 = vmatpush1.msra.mxu0 0.0
      %1941 = vmatprep.subr.mxu0 0.0
      %1942 = vmatpush1.msra.mxu0 0.0
      %1943 = vmatprep.subr.mxu0 0.0
      %1944 = vmatpush1.msra.mxu0 0.0
      %1945 = vmatprep.subr.mxu0 0.0
      %1946 = vmatpush1.msra.mxu0 0.0
      %1947 = vmatprep.subr.mxu0 0.0
      %1948 = vmatpush1.msra.mxu0 0.0
      %1949 = vmatprep.subr.mxu0 0.0
      %1950 = vmatpush1.msra.mxu0 0.0
      %1951 = vmatprep.subr.mxu0 0.0
      %1952 = vmatpush1.msra.mxu0 0.0
      %1953 = vmatprep.subr.mxu0 0.0
      %1954 = vmatpush1.msra.mxu0 0.0
      %1955 = vmatprep.subr.mxu0 0.0
      %1956 = vmatpush1.msra.mxu0 0.0
      %1957 = vmatprep.subr.mxu0 0.0
      %1958 = vmatpush1.msra.mxu0 0.0
      %1959 = vmatprep.subr.mxu0 0.0
      %1960 = vmatpush1.msra.mxu0 0.0
      %1961 = vmatprep.subr.mxu0 0.0
      %1962 = vmatpush1.msra.mxu0 0.0
      %1963 = vmatprep.subr.mxu0 0.0
      %1964 = vmatpush1.msra.mxu0 0.0
      %1965 = vmatprep.subr.mxu0 0.0
      %1966 = vmatpush1.msra.mxu0 0.0
      %1967 = vmatprep.subr.mxu0 0.0
      %1968 = vmatpush1.msra.mxu0 0.0
      %1969 = vmatprep.subr.mxu0 0.0
      %1970 = vmatpush1.msra.mxu0 0.0
      %1971 = vmatprep.subr.mxu0 0.0
      %1972 = vmatpush1.msra.mxu0 0.0
      %1973 = vmatprep.subr.mxu0 0.0
      %1974 = vmatpush1.msra.mxu0 0.0
      %1975 = vmatprep.subr.mxu0 0.0
      %1976 = vmatpush1.msra.mxu0 0.0
      %1977 = vmatprep.subr.mxu0 0.0
      %1978 = vmatpush1.msra.mxu0 0.0
      %1979 = vmatprep.subr.mxu0 0.0
      %1980 = vmatpush1.msra.mxu0 0.0
      %1981 = vmatprep.subr.mxu0 0.0
      %1982 = vmatpush1.msra.mxu0 0.0
      %1983 = vmatprep.subr.mxu0 0.0
      %1984 = vmatpush1.msra.mxu0 0.0
      %1985 = vmatprep.subr.mxu0 0.0
      %1986 = vmatpush1.msra.mxu0 0.0
      %1987 = vmatprep.mubr.f32.mxu0 0.0
      %1988 = vmatmul.mubr.f32.gmra.mrb[0].mxu0 %v1921
      %v1989 = vpop.f32.mrb[0].mxu0
      %v1990 = vadd.f32 0.0, %v1989
      %v1991 = vpop.f32.mrb[0].mxu0
      %1992 = vdwg.mxu0
      %v1993 = vadd.f32 %v1919, %v1990
      %v1994 = vmax.f32 %v1993, 0.0
      %v1996 = vsel %vm1441, %v1994, 0
      %1998 = vmatprep.subr.mxu0 0.0
      %1999 = vmatpush1.msra.mxu0 %v473
      %2000 = vmatprep.subr.mxu0 0.0
      %2001 = vmatpush1.msra.mxu0 %v474
      %2002 = vmatprep.subr.mxu0 0.0
      %2003 = vmatpush1.msra.mxu0 0.0
      %2004 = vmatprep.subr.mxu0 0.0
      %2005 = vmatpush1.msra.mxu0 0.0
      %2006 = vmatprep.subr.mxu0 0.0
      %2007 = vmatpush1.msra.mxu0 0.0
      %2008 = vmatprep.subr.mxu0 0.0
      %2009 = vmatpush1.msra.mxu0 0.0
      %2010 = vmatprep.subr.mxu0 0.0
      %2011 = vmatpush1.msra.mxu0 0.0
      %2012 = vmatprep.subr.mxu0 0.0
      %2013 = vmatpush1.msra.mxu0 0.0
      %2014 = vmatprep.subr.mxu0 0.0
      %2015 = vmatpush1.msra.mxu0 0.0
      %2016 = vmatprep.subr.mxu0 0.0
      %2017 = vmatpush1.msra.mxu0 0.0
      %2018 = vmatprep.subr.mxu0 0.0
      %2019 = vmatpush1.msra.mxu0 0.0
      %2020 = vmatprep.subr.mxu0 0.0
      %2021 = vmatpush1.msra.mxu0 0.0
      %2022 = vmatprep.subr.mxu0 0.0
      %2023 = vmatpush1.msra.mxu0 0.0
      %2024 = vmatprep.subr.mxu0 0.0
      %2025 = vmatpush1.msra.mxu0 0.0
      %2026 = vmatprep.subr.mxu0 0.0
      %2027 = vmatpush1.msra.mxu0 0.0
      %2028 = vmatprep.subr.mxu0 0.0
      %2029 = vmatpush1.msra.mxu0 0.0
      %2030 = vmatprep.subr.mxu0 0.0
      %2031 = vmatpush1.msra.mxu0 0.0
      %2032 = vmatprep.subr.mxu0 0.0
      %2033 = vmatpush1.msra.mxu0 0.0
      %2034 = vmatprep.subr.mxu0 0.0
      %2035 = vmatpush1.msra.mxu0 0.0
      %2036 = vmatprep.subr.mxu0 0.0
      %2037 = vmatpush1.msra.mxu0 0.0
      %2038 = vmatprep.subr.mxu0 0.0
      %2039 = vmatpush1.msra.mxu0 0.0
      %2040 = vmatprep.subr.mxu0 0.0
      %2041 = vmatpush1.msra.mxu0 0.0
      %2042 = vmatprep.subr.mxu0 0.0
      %2043 = vmatpush1.msra.mxu0 0.0
      %2044 = vmatprep.subr.mxu0 0.0
      %2045 = vmatpush1.msra.mxu0 0.0
      %2046 = vmatprep.subr.mxu0 0.0
      %2047 = vmatpush1.msra.mxu0 0.0
      %2048 = vmatprep.subr.mxu0 0.0
      %2049 = vmatpush1.msra.mxu0 0.0
      %2050 = vmatprep.subr.mxu0 0.0
      %2051 = vmatpush1.msra.mxu0 0.0
      %2052 = vmatprep.subr.mxu0 0.0
      %2053 = vmatpush1.msra.mxu0 0.0
      %2054 = vmatprep.subr.mxu0 0.0
      %2055 = vmatpush1.msra.mxu0 0.0
      %2056 = vmatprep.subr.mxu0 0.0
      %2057 = vmatpush1.msra.mxu0 0.0
      %2058 = vmatprep.subr.mxu0 0.0
      %2059 = vmatpush1.msra.mxu0 0.0
      %2060 = vmatprep.subr.mxu0 0.0
      %2061 = vmatpush1.msra.mxu0 0.0
      %2062 = vmatprep.mubr.f32.mxu0 0.0
      %2063 = vmatmul.mubr.f32.gmra.mrb[0].mxu0 %v1996
      %v2064 = vpop.f32.mrb[0].mxu0
      %v2065 = vadd.f32 %v1439, %v2064
      %v2066 = vpop.f32.mrb[0].mxu0
      %2067 = vdwg.mxu0
      %v2068 = vxor.u32 %v2065, 2147483648
      %v2069 = vmul.f32 %v2068, 1.442695
      %v2070 = vpow.pop %v2069
      %v2071 = vadd.f32 %v2070, 1.0
      %v2072 = vrcp.pop %v2071
      %v2073 = vmul.f32 1.0, %v2072
      %v2075 = vsel %vm555, %v2073, 0
      %2077 = vmatprep.subr.mxu0 0.0
      %2078 = vmatpush1.msra.mxu0 %v899
      %2079 = vmatprep.subr.mxu0 0.0
      %2080 = vmatpush1.msra.mxu0 0.0
      %2081 = vmatprep.subr.mxu0 0.0
      %2082 = vmatpush1.msra.mxu0 0.0
      %2083 = vmatprep.subr.mxu0 0.0
      %2084 = vmatpush1.msra.mxu0 0.0
      %2085 = vmatprep.subr.mxu0 0.0
      %2086 = vmatpush1.msra.mxu0 0.0
      %2087 = vmatprep.subr.mxu0 0.0
      %2088 = vmatpush1.msra.mxu0 0.0
      %2089 = vmatprep.subr.mxu0 0.0
      %2090 = vmatpush1.msra.mxu0 0.0
      %2091 = vmatprep.subr.mxu0 0.0
      %2092 = vmatpush1.msra.mxu0 0.0
      %2093 = vmatprep.subr.mxu0 0.0
      %2094 = vmatpush1.msra.mxu0 0.0
      %2095 = vmatprep.subr.mxu0 0.0
      %2096 = vmatpush1.msra.mxu0 0.0
      %2097 = vmatprep.subr.mxu0 0.0
      %2098 = vmatpush1.msra.mxu0 0.0
      %2099 = vmatprep.subr.mxu0 0.0
      %2100 = vmatpush1.msra.mxu0 0.0
      %2101 = vmatprep.subr.mxu0 0.0
      %2102 = vmatpush1.msra.mxu0 0.0
      %2103 = vmatprep.subr.mxu0 0.0
      %2104 = vmatpush1.msra.mxu0 0.0
      %2105 = vmatprep.subr.mxu0 0.0
      %2106 = vmatpush1.msra.mxu0 0.0
      %2107 = vmatprep.subr.mxu0 0.0
      %2108 = vmatpush1.msra.mxu0 0.0
      %2109 = vmatprep.subr.mxu0 0.0
      %2110 = vmatpush1.msra.mxu0 0.0
      %2111 = vmatprep.subr.mxu0 0.0
      %2112 = vmatpush1.msra.mxu0 0.0
      %2113 = vmatprep.subr.mxu0 0.0
      %2114 = vmatpush1.msra.mxu0 0.0
      %2115 = vmatprep.subr.mxu0 0.0
      %2116 = vmatpush1.msra.mxu0 0.0
      %2117 = vmatprep.subr.mxu0 0.0
      %2118 = vmatpush1.msra.mxu0 0.0
      %2119 = vmatprep.subr.mxu0 0.0
      %2120 = vmatpush1.msra.mxu0 0.0
      %2121 = vmatprep.subr.mxu0 0.0
      %2122 = vmatpush1.msra.mxu0 0.0
      %2123 = vmatprep.subr.mxu0 0.0
      %2124 = vmatpush1.msra.mxu0 0.0
      %2125 = vmatprep.subr.mxu0 0.0
      %2126 = vmatpush1.msra.mxu0 0.0
      %2127 = vmatprep.subr.mxu0 0.0
      %2128 = vmatpush1.msra.mxu0 0.0
      %2129 = vmatprep.subr.mxu0 0.0
      %2130 = vmatpush1.msra.mxu0 0.0
      %2131 = vmatprep.subr.mxu0 0.0
      %2132 = vmatpush1.msra.mxu0 0.0
      %2133 = vmatprep.subr.mxu0 0.0
      %2134 = vmatpush1.msra.mxu0 0.0
      %2135 = vmatprep.subr.mxu0 0.0
      %2136 = vmatpush1.msra.mxu0 0.0
      %2137 = vmatprep.subr.mxu0 0.0
      %2138 = vmatpush1.msra.mxu0 0.0
      %2139 = vmatprep.subr.mxu0 0.0
      %2140 = vmatpush1.msra.mxu0 0.0
      %2141 = vmatprep.mubr.f32.mxu0 0.0
      %2142 = vmatmul.mubr.f32.gmra.mrb[0].mxu0 %v2075
      %v2143 = vpop.f32.mrb[0].mxu0
      %v2144 = vadd.f32 0.0, %v2143
      %v2145 = vpop.f32.mrb[0].mxu0
      %2146 = vdwg.mxu0
      %2147 = vmatprep.subr.mxu0 0.0
      %2148 = vmatpush1.msra.mxu0 %v2144
      %2149 = vmatprep.subr.mxu0 0.0
      %2150 = vmatpush1.msra.mxu0 0.0
      %2151 = vmatprep.subr.mxu0 0.0
      %2152 = vmatpush1.msra.mxu0 0.0
      %2153 = vmatprep.subr.mxu0 0.0
      %2154 = vmatpush1.msra.mxu0 0.0
      %2155 = vmatprep.subr.mxu0 0.0
      %2156 = vmatpush1.msra.mxu0 0.0
      %2157 = vmatprep.subr.mxu0 0.0
      %2158 = vmatpush1.msra.mxu0 0.0
      %2159 = vmatprep.subr.mxu0 0.0
      %2160 = vmatpush1.msra.mxu0 0.0
      %2161 = vmatprep.subr.mxu0 0.0
      %2162 = vmatpush1.msra.mxu0 0.0
      %2163 = vmatprep.subr.mxu0 0.0
      %2164 = vmatpush1.msra.mxu0 0.0
      %2165 = vmatprep.subr.mxu0 0.0
      %2166 = vmatpush1.msra.mxu0 0.0
      %2167 = vmatprep.subr.mxu0 0.0
      %2168 = vmatpush1.msra.mxu0 0.0
      %2169 = vmatprep.subr.mxu0 0.0
      %2170 = vmatpush1.msra.mxu0 0.0
      %2171 = vmatprep.subr.mxu0 0.0
      %2172 = vmatpush1.msra.mxu0 0.0
      %2173 = vmatprep.subr.mxu0 0.0
      %2174 = vmatpush1.msra.mxu0 0.0
      %2175 = vmatprep.subr.mxu0 0.0
      %2176 = vmatpush1.msra.mxu0 0.0
      %2177 = vmatprep.subr.mxu0 0.0
      %2178 = vmatpush1.msra.mxu0 0.0
      %2179 = vmatprep.subr.mxu0 0.0
      %2180 = vmatpush1.msra.mxu0 0.0
      %2181 = vmatprep.subr.mxu0 0.0
      %2182 = vmatpush1.msra.mxu0 0.0
      %2183 = vmatprep.subr.mxu0 0.0
      %2184 = vmatpush1.msra.mxu0 0.0
      %2185 = vmatprep.subr.mxu0 0.0
      %2186 = vmatpush1.msra.mxu0 0.0
      %2187 = vmatprep.subr.mxu0 0.0
      %2188 = vmatpush1.msra.mxu0 0.0
      %2189 = vmatprep.subr.mxu0 0.0
      %2190 = vmatpush1.msra.mxu0 0.0
      %2191 = vmatprep.subr.mxu0 0.0
      %2192 = vmatpush1.msra.mxu0 0.0
      %2193 = vmatprep.subr.mxu0 0.0
      %2194 = vmatpush1.msra.mxu0 0.0
      %2195 = vmatprep.subr.mxu0 0.0
      %2196 = vmatpush1.msra.mxu0 0.0
      %2197 = vmatprep.subr.mxu0 0.0
      %2198 = vmatpush1.msra.mxu0 0.0
      %2199 = vmatprep.subr.mxu0 0.0
      %2200 = vmatpush1.msra.mxu0 0.0
      %2201 = vmatprep.subr.mxu0 0.0
      %2202 = vmatpush1.msra.mxu0 0.0
      %2203 = vmatprep.subr.mxu0 0.0
      %2204 = vmatpush1.msra.mxu0 0.0
      %2205 = vmatprep.subr.mxu0 0.0
      %2206 = vmatpush1.msra.mxu0 0.0
      %2207 = vmatprep.subr.mxu0 0.0
      %2208 = vmatpush1.msra.mxu0 0.0
      %2209 = vmatprep.subr.mxu0 0.0
      %2210 = vmatpush1.msra.mxu0 0.0
      %2211 = vmatprep.mubr.f32.mxu0 0.0
      %2212 = vmatmul.mubr.f32.gmra.mrb[0].mxu0 %v682
      %v2213 = vpop.f32.mrb[0].mxu0
      %v2214 = vadd.f32 0.0, %v2213
      %v2215 = vpop.f32.mrb[0].mxu0
      %2216 = vmatprep.mubr.f32.mxu0 0.0
      %2217 = vmatmul.mubr.f32.gmra.mrb[0].mxu0 %v685
      %v2218 = vpop.f32.mrb[0].mxu0
      %v2219 = vadd.f32 0.0, %v2218
      %v2220 = vpop.f32.mrb[0].mxu0
      %2221 = vmatprep.mubr.f32.mxu0 0.0
      %2222 = vmatmul.mubr.f32.gmra.mrb[0].mxu0 %v688
      %v2223 = vpop.f32.mrb[0].mxu0
      %v2224 = vadd.f32 0.0, %v2223
      %v2225 = vpop.f32.mrb[0].mxu0
      %2226 = vmatprep.mubr.f32.mxu0 0.0
      %2227 = vmatmul.mubr.f32.gmra.mrb[0].mxu0 %v691
      %v2228 = vpop.f32.mrb[0].mxu0
      %v2229 = vadd.f32 0.0, %v2228
      %v2230 = vpop.f32.mrb[0].mxu0
      %2231 = vmatprep.mubr.f32.mxu0 0.0
      %2232 = vmatmul.mubr.f32.gmra.mrb[0].mxu0 %v694
      %v2233 = vpop.f32.mrb[0].mxu0
      %v2234 = vadd.f32 0.0, %v2233
      %v2235 = vpop.f32.mrb[0].mxu0
      %2236 = vmatprep.mubr.f32.mxu0 0.0
      %2237 = vmatmul.mubr.f32.gmra.mrb[0].mxu0 %v697
      %v2238 = vpop.f32.mrb[0].mxu0
      %v2239 = vadd.f32 0.0, %v2238
      %v2240 = vpop.f32.mrb[0].mxu0
      %2241 = vmatprep.mubr.f32.mxu0 0.0
      %2242 = vmatmul.mubr.f32.gmra.mrb[0].mxu0 %v700
      %v2243 = vpop.f32.mrb[0].mxu0
      %v2244 = vadd.f32 0.0, %v2243
      %v2245 = vpop.f32.mrb[0].mxu0
      %2246 = vdwg.mxu0
      %v2247 = vadd.f32 %v808, %v2214
      %v2248 = vadd.f32 %v809, %v2219
      %v2249 = vadd.f32 %v810, %v2224
      %v2250 = vadd.f32 %v811, %v2229
      %v2251 = vadd.f32 %v812, %v2234
      %v2252 = vadd.f32 %v813, %v2239
      %v2253 = vadd.f32 %v814, %v2244
      %v2254 = vmax.f32 %v2247, 0.0
      %v2255 = vmax.f32 %v2248, 0.0
      %v2256 = vmax.f32 %v2249, 0.0
      %v2257 = vmax.f32 %v2250, 0.0
      %v2258 = vmax.f32 %v2251, 0.0
      %v2259 = vmax.f32 %v2252, 0.0
      %v2260 = vmax.f32 %v2253, 0.0
      %v2262 = vsel %vm1091, %v2254, 0
      %v2265 = vsel %vm1091, %v2255, 0
      %v2268 = vsel %vm1091, %v2256, 0
      %v2271 = vsel %vm1091, %v2257, 0
      %v2274 = vsel %vm1091, %v2258, 0
      %v2277 = vsel %vm1091, %v2259, 0
      %v2280 = vsel %vm1091, %v2260, 0
      %2282 = vmatprep.subr.mxu0 0.0
      %2283 = vmatpush1.msra.mxu0 %v462
      %2284 = vmatprep.subr.mxu0 0.0
      %2285 = vmatpush1.msra.mxu0 %v463
      %2286 = vmatprep.subr.mxu0 0.0
      %2287 = vmatpush1.msra.mxu0 %v464
      %2288 = vmatprep.subr.mxu0 0.0
      %2289 = vmatpush1.msra.mxu0 %v465
      %2290 = vmatprep.subr.mxu0 0.0
      %2291 = vmatpush1.msra.mxu0 0.0
      %2292 = vmatprep.subr.mxu0 0.0
      %2293 = vmatpush1.msra.mxu0 0.0
      %2294 = vmatprep.subr.mxu0 0.0
      %2295 = vmatpush1.msra.mxu0 0.0
      %2296 = vmatprep.subr.mxu0 0.0
      %2297 = vmatpush1.msra.mxu0 0.0
      %2298 = vmatprep.subr.mxu0 0.0
      %2299 = vmatpush1.msra.mxu0 0.0
      %2300 = vmatprep.subr.mxu0 0.0
      %2301 = vmatpush1.msra.mxu0 0.0
      %2302 = vmatprep.subr.mxu0 0.0
      %2303 = vmatpush1.msra.mxu0 0.0
      %2304 = vmatprep.subr.mxu0 0.0
      %2305 = vmatpush1.msra.mxu0 0.0
      %2306 = vmatprep.subr.mxu0 0.0
      %2307 = vmatpush1.msra.mxu0 0.0
      %2308 = vmatprep.subr.mxu0 0.0
      %2309 = vmatpush1.msra.mxu0 0.0
      %2310 = vmatprep.subr.mxu0 0.0
      %2311 = vmatpush1.msra.mxu0 0.0
      %2312 = vmatprep.subr.mxu0 0.0
      %2313 = vmatpush1.msra.mxu0 0.0
      %2314 = vmatprep.subr.mxu0 0.0
      %2315 = vmatpush1.msra.mxu0 0.0
      %2316 = vmatprep.subr.mxu0 0.0
      %2317 = vmatpush1.msra.mxu0 0.0
      %2318 = vmatprep.subr.mxu0 0.0
      %2319 = vmatpush1.msra.mxu0 0.0
      %2320 = vmatprep.subr.mxu0 0.0
      %2321 = vmatpush1.msra.mxu0 0.0
      %2322 = vmatprep.subr.mxu0 0.0
      %2323 = vmatpush1.msra.mxu0 0.0
      %2324 = vmatprep.subr.mxu0 0.0
      %2325 = vmatpush1.msra.mxu0 0.0
      %2326 = vmatprep.subr.mxu0 0.0
      %2327 = vmatpush1.msra.mxu0 0.0
      %2328 = vmatprep.subr.mxu0 0.0
      %2329 = vmatpush1.msra.mxu0 0.0
      %2330 = vmatprep.subr.mxu0 0.0
      %2331 = vmatpush1.msra.mxu0 0.0
      %2332 = vmatprep.subr.mxu0 0.0
      %2333 = vmatpush1.msra.mxu0 0.0
      %2334 = vmatprep.subr.mxu0 0.0
      %2335 = vmatpush1.msra.mxu0 0.0
      %2336 = vmatprep.subr.mxu0 0.0
      %2337 = vmatpush1.msra.mxu0 0.0
      %2338 = vmatprep.subr.mxu0 0.0
      %2339 = vmatpush1.msra.mxu0 0.0
      %2340 = vmatprep.subr.mxu0 0.0
      %2341 = vmatpush1.msra.mxu0 0.0
      %2342 = vmatprep.subr.mxu0 0.0
      %2343 = vmatpush1.msra.mxu0 0.0
      %2344 = vmatprep.subr.mxu0 0.0
      %2345 = vmatpush1.msra.mxu0 0.0
      %2346 = vmatprep.mubr.f32.mxu0 0.0
      %2347 = vmatmul.mubr.f32.gmra.mrb[0].mxu0 %v2262
      %v2348 = vpop.f32.mrb[0].mxu0
      %v2349 = vadd.f32 %v1089, %v2348
      %v2350 = vpop.f32.mrb[0].mxu0
      %2351 = vmatprep.mubr.f32.mxu0 0.0
      %2352 = vmatmul.mubr.f32.gmra.mrb[0].mxu0 %v2265
      %v2353 = vpop.f32.mrb[0].mxu0
      %v2354 = vadd.f32 %v1089, %v2353
      %v2355 = vpop.f32.mrb[0].mxu0
      %2356 = vmatprep.mubr.f32.mxu0 0.0
      %2357 = vmatmul.mubr.f32.gmra.mrb[0].mxu0 %v2268
      %v2358 = vpop.f32.mrb[0].mxu0
      %v2359 = vadd.f32 %v1089, %v2358
      %v2360 = vpop.f32.mrb[0].mxu0
      %2361 = vmatprep.mubr.f32.mxu0 0.0
      %2362 = vmatmul.mubr.f32.gmra.mrb[0].mxu0 %v2271
      %v2363 = vpop.f32.mrb[0].mxu0
      %v2364 = vadd.f32 %v1089, %v2363
      %v2365 = vpop.f32.mrb[0].mxu0
      %2366 = vmatprep.mubr.f32.mxu0 0.0
      %2367 = vmatmul.mubr.f32.gmra.mrb[0].mxu0 %v2274
      %v2368 = vpop.f32.mrb[0].mxu0
      %v2369 = vadd.f32 %v1089, %v2368
      %v2370 = vpop.f32.mrb[0].mxu0
      %2371 = vmatprep.mubr.f32.mxu0 0.0
      %2372 = vmatmul.mubr.f32.gmra.mrb[0].mxu0 %v2277
      %v2373 = vpop.f32.mrb[0].mxu0
      %v2374 = vadd.f32 %v1089, %v2373
      %v2375 = vpop.f32.mrb[0].mxu0
      %2376 = vmatprep.mubr.f32.mxu0 0.0
      %2377 = vmatmul.mubr.f32.gmra.mrb[0].mxu0 %v2280
      %v2378 = vpop.f32.mrb[0].mxu0
      %v2379 = vadd.f32 %v1089, %v2378
      %v2380 = vpop.f32.mrb[0].mxu0
      %2381 = vdwg.mxu0
      %v2382 = vmax.f32 %v2349, 0.0
      %v2383 = vmax.f32 %v2354, 0.0
      %v2384 = vmax.f32 %v2359, 0.0
      %v2385 = vmax.f32 %v2364, 0.0
      %v2386 = vmax.f32 %v2369, 0.0
      %v2387 = vmax.f32 %v2374, 0.0
      %v2388 = vmax.f32 %v2379, 0.0
      %v2389 = vmul.f32 %v2382, %v1223
      %v2390 = vmul.f32 %v2383, %v1228
      %v2391 = vmul.f32 %v2384, %v1233
      %v2392 = vmul.f32 %v2385, %v1238
      %v2393 = vmul.f32 %v2386, %v1243
      %v2394 = vmul.f32 %v2387, %v1248
      %v2395 = vmul.f32 %v2388, %v1253
      %v2396 = vmax.f32 %v2389, %v2390
      %v2397 = vmax.f32 %v2396, %v2391
      %v2398 = vmax.f32 %v2397, %v2392
      %v2399 = vmax.f32 %v2398, %v2393
      %v2400 = vmax.f32 %v2399, %v2394
      %v2401 = vmax.f32 %v2400, %v2395
      %2402 = vmatprep.subr.mxu0 0.0
      %2403 = vmatpush1.msra.mxu0 %v1269
      %2404 = vmatprep.subr.mxu0 0.0
      %2405 = vmatpush1.msra.mxu0 0.0
      %2406 = vmatprep.subr.mxu0 0.0
      %2407 = vmatpush1.msra.mxu0 0.0
      %2408 = vmatprep.subr.mxu0 0.0
      %2409 = vmatpush1.msra.mxu0 0.0
      %2410 = vmatprep.subr.mxu0 0.0
      %2411 = vmatpush1.msra.mxu0 0.0
      %2412 = vmatprep.subr.mxu0 0.0
      %2413 = vmatpush1.msra.mxu0 0.0
      %2414 = vmatprep.subr.mxu0 0.0
      %2415 = vmatpush1.msra.mxu0 0.0
      %2416 = vmatprep.subr.mxu0 0.0
      %2417 = vmatpush1.msra.mxu0 0.0
      %2418 = vmatprep.subr.mxu0 0.0
      %2419 = vmatpush1.msra.mxu0 0.0
      %2420 = vmatprep.subr.mxu0 0.0
      %2421 = vmatpush1.msra.mxu0 0.0
      %2422 = vmatprep.subr.mxu0 0.0
      %2423 = vmatpush1.msra.mxu0 0.0
      %2424 = vmatprep.subr.mxu0 0.0
      %2425 = vmatpush1.msra.mxu0 0.0
      %2426 = vmatprep.subr.mxu0 0.0
      %2427 = vmatpush1.msra.mxu0 0.0
      %2428 = vmatprep.subr.mxu0 0.0
      %2429 = vmatpush1.msra.mxu0 0.0
      %2430 = vmatprep.subr.mxu0 0.0
      %2431 = vmatpush1.msra.mxu0 0.0
      %2432 = vmatprep.subr.mxu0 0.0
      %2433 = vmatpush1.msra.mxu0 0.0
      %2434 = vmatprep.subr.mxu0 0.0
      %2435 = vmatpush1.msra.mxu0 0.0
      %2436 = vmatprep.subr.mxu0 0.0
      %2437 = vmatpush1.msra.mxu0 0.0
      %2438 = vmatprep.subr.mxu0 0.0
      %2439 = vmatpush1.msra.mxu0 0.0
      %2440 = vmatprep.subr.mxu0 0.0
      %2441 = vmatpush1.msra.mxu0 0.0
      %2442 = vmatprep.subr.mxu0 0.0
      %2443 = vmatpush1.msra.mxu0 0.0
      %2444 = vmatprep.subr.mxu0 0.0
      %2445 = vmatpush1.msra.mxu0 0.0
      %2446 = vmatprep.subr.mxu0 0.0
      %2447 = vmatpush1.msra.mxu0 0.0
      %2448 = vmatprep.subr.mxu0 0.0
      %2449 = vmatpush1.msra.mxu0 0.0
      %2450 = vmatprep.subr.mxu0 0.0
      %2451 = vmatpush1.msra.mxu0 0.0
      %2452 = vmatprep.subr.mxu0 0.0
      %2453 = vmatpush1.msra.mxu0 0.0
      %2454 = vmatprep.subr.mxu0 0.0
      %2455 = vmatpush1.msra.mxu0 0.0
      %2456 = vmatprep.subr.mxu0 0.0
      %2457 = vmatpush1.msra.mxu0 0.0
      %2458 = vmatprep.subr.mxu0 0.0
      %2459 = vmatpush1.msra.mxu0 0.0
      %2460 = vmatprep.subr.mxu0 0.0
      %2461 = vmatpush1.msra.mxu0 0.0
      %2462 = vmatprep.subr.mxu0 0.0
      %2463 = vmatpush1.msra.mxu0 0.0
      %2464 = vmatprep.subr.mxu0 0.0
      %2465 = vmatpush1.msra.mxu0 0.0
      %2466 = vmatprep.mubr.f32.mxu0 0.0
      %2467 = vmatmul.mubr.f32.gmra.mrb[0].mxu0 %v2075
      %v2468 = vpop.f32.mrb[0].mxu0
      %v2469 = vadd.f32 0.0, %v2468
      %v2470 = vpop.f32.mrb[0].mxu0
      %2471 = vdwg.mxu0
      %v2472 = vadd.f32 %v891, %v2469
      %v2474 = vsel %vm1091, %v2401, 0
      %2476 = vmatprep.subr.mxu0 0.0
      %2477 = vmatpush1.msra.mxu0 %v1349
      %2478 = vmatprep.subr.mxu0 0.0
      %2479 = vmatpush1.msra.mxu0 %v1351
      %2480 = vmatprep.subr.mxu0 0.0
      %2481 = vmatpush1.msra.mxu0 %v1353
      %2482 = vmatprep.subr.mxu0 0.0
      %2483 = vmatpush1.msra.mxu0 %v1355
      %2484 = vmatprep.subr.mxu0 0.0
      %2485 = vmatpush1.msra.mxu0 0.0
      %2486 = vmatprep.subr.mxu0 0.0
      %2487 = vmatpush1.msra.mxu0 0.0
      %2488 = vmatprep.subr.mxu0 0.0
      %2489 = vmatpush1.msra.mxu0 0.0
      %2490 = vmatprep.subr.mxu0 0.0
      %2491 = vmatpush1.msra.mxu0 0.0
      %2492 = vmatprep.subr.mxu0 0.0
      %2493 = vmatpush1.msra.mxu0 0.0
      %2494 = vmatprep.subr.mxu0 0.0
      %2495 = vmatpush1.msra.mxu0 0.0
      %2496 = vmatprep.subr.mxu0 0.0
      %2497 = vmatpush1.msra.mxu0 0.0
      %2498 = vmatprep.subr.mxu0 0.0
      %2499 = vmatpush1.msra.mxu0 0.0
      %2500 = vmatprep.subr.mxu0 0.0
      %2501 = vmatpush1.msra.mxu0 0.0
      %2502 = vmatprep.subr.mxu0 0.0
      %2503 = vmatpush1.msra.mxu0 0.0
      %2504 = vmatprep.subr.mxu0 0.0
      %2505 = vmatpush1.msra.mxu0 0.0
      %2506 = vmatprep.subr.mxu0 0.0
      %2507 = vmatpush1.msra.mxu0 0.0
      %2508 = vmatprep.subr.mxu0 0.0
      %2509 = vmatpush1.msra.mxu0 0.0
      %2510 = vmatprep.subr.mxu0 0.0
      %2511 = vmatpush1.msra.mxu0 0.0
      %2512 = vmatprep.subr.mxu0 0.0
      %2513 = vmatpush1.msra.mxu0 0.0
      %2514 = vmatprep.subr.mxu0 0.0
      %2515 = vmatpush1.msra.mxu0 0.0
      %2516 = vmatprep.subr.mxu0 0.0
      %2517 = vmatpush1.msra.mxu0 0.0
      %2518 = vmatprep.subr.mxu0 0.0
      %2519 = vmatpush1.msra.mxu0 0.0
      %2520 = vmatprep.subr.mxu0 0.0
      %2521 = vmatpush1.msra.mxu0 0.0
      %2522 = vmatprep.subr.mxu0 0.0
      %2523 = vmatpush1.msra.mxu0 0.0
      %2524 = vmatprep.subr.mxu0 0.0
      %2525 = vmatpush1.msra.mxu0 0.0
      %2526 = vmatprep.subr.mxu0 0.0
      %2527 = vmatpush1.msra.mxu0 0.0
      %2528 = vmatprep.subr.mxu0 0.0
      %2529 = vmatpush1.msra.mxu0 0.0
      %2530 = vmatprep.subr.mxu0 0.0
      %2531 = vmatpush1.msra.mxu0 0.0
      %2532 = vmatprep.subr.mxu0 0.0
      %2533 = vmatpush1.msra.mxu0 0.0
      %2534 = vmatprep.subr.mxu0 0.0
      %2535 = vmatpush1.msra.mxu0 0.0
      %2536 = vmatprep.subr.mxu0 0.0
      %2537 = vmatpush1.msra.mxu0 0.0
      %2538 = vmatprep.subr.mxu0 0.0
      %2539 = vmatpush1.msra.mxu0 0.0
      %2540 = vmatprep.mubr.f32.mxu0 0.0
      %2541 = vmatmul.mubr.f32.gmra.mrb[0].mxu0 %v2474
      %v2542 = vpop.f32.mrb[0].mxu0
      %v2543 = vadd.f32 0.0, %v2542
      %v2544 = vpop.f32.mrb[0].mxu0
      %2545 = vdwg.mxu0
      %v2546 = vadd.f32 %v2472, %v2543
      %v2547 = vmax.f32 %v2546, 0.0
      %v2549 = vsel %vm1441, %v2547, 0
      %2551 = vmatprep.subr.mxu0 0.0
      %2552 = vmatpush1.msra.mxu0 %v473
      %2553 = vmatprep.subr.mxu0 0.0
      %2554 = vmatpush1.msra.mxu0 %v474
      %2555 = vmatprep.subr.mxu0 0.0
      %2556 = vmatpush1.msra.mxu0 0.0
      %2557 = vmatprep.subr.mxu0 0.0
      %2558 = vmatpush1.msra.mxu0 0.0
      %2559 = vmatprep.subr.mxu0 0.0
      %2560 = vmatpush1.msra.mxu0 0.0
      %2561 = vmatprep.subr.mxu0 0.0
      %2562 = vmatpush1.msra.mxu0 0.0
      %2563 = vmatprep.subr.mxu0 0.0
      %2564 = vmatpush1.msra.mxu0 0.0
      %2565 = vmatprep.subr.mxu0 0.0
      %2566 = vmatpush1.msra.mxu0 0.0
      %2567 = vmatprep.subr.mxu0 0.0
      %2568 = vmatpush1.msra.mxu0 0.0
      %2569 = vmatprep.subr.mxu0 0.0
      %2570 = vmatpush1.msra.mxu0 0.0
      %2571 = vmatprep.subr.mxu0 0.0
      %2572 = vmatpush1.msra.mxu0 0.0
      %2573 = vmatprep.subr.mxu0 0.0
      %2574 = vmatpush1.msra.mxu0 0.0
      %2575 = vmatprep.subr.mxu0 0.0
      %2576 = vmatpush1.msra.mxu0 0.0
      %2577 = vmatprep.subr.mxu0 0.0
      %2578 = vmatpush1.msra.mxu0 0.0
      %2579 = vmatprep.subr.mxu0 0.0
      %2580 = vmatpush1.msra.mxu0 0.0
      %2581 = vmatprep.subr.mxu0 0.0
      %2582 = vmatpush1.msra.mxu0 0.0
      %2583 = vmatprep.subr.mxu0 0.0
      %2584 = vmatpush1.msra.mxu0 0.0
      %2585 = vmatprep.subr.mxu0 0.0
      %2586 = vmatpush1.msra.mxu0 0.0
      %2587 = vmatprep.subr.mxu0 0.0
      %2588 = vmatpush1.msra.mxu0 0.0
      %2589 = vmatprep.subr.mxu0 0.0
      %2590 = vmatpush1.msra.mxu0 0.0
      %2591 = vmatprep.subr.mxu0 0.0
      %2592 = vmatpush1.msra.mxu0 0.0
      %2593 = vmatprep.subr.mxu0 0.0
      %2594 = vmatpush1.msra.mxu0 0.0
      %2595 = vmatprep.subr.mxu0 0.0
      %2596 = vmatpush1.msra.mxu0 0.0
      %2597 = vmatprep.subr.mxu0 0.0
      %2598 = vmatpush1.msra.mxu0 0.0
      %2599 = vmatprep.subr.mxu0 0.0
      %2600 = vmatpush1.msra.mxu0 0.0
      %2601 = vmatprep.subr.mxu0 0.0
      %2602 = vmatpush1.msra.mxu0 0.0
      %2603 = vmatprep.subr.mxu0 0.0
      %2604 = vmatpush1.msra.mxu0 0.0
      %2605 = vmatprep.subr.mxu0 0.0
      %2606 = vmatpush1.msra.mxu0 0.0
      %2607 = vmatprep.subr.mxu0 0.0
      %2608 = vmatpush1.msra.mxu0 0.0
      %2609 = vmatprep.subr.mxu0 0.0
      %2610 = vmatpush1.msra.mxu0 0.0
      %2611 = vmatprep.subr.mxu0 0.0
      %2612 = vmatpush1.msra.mxu0 0.0
      %2613 = vmatprep.subr.mxu0 0.0
      %2614 = vmatpush1.msra.mxu0 0.0
      %2615 = vmatprep.mubr.f32.mxu0 0.0
      %2616 = vmatmul.mubr.f32.gmra.mrb[0].mxu0 %v2549
      %v2617 = vpop.f32.mrb[0].mxu0
      %v2618 = vadd.f32 %v1439, %v2617
      %v2619 = vpop.f32.mrb[0].mxu0
      %2620 = vdwg.mxu0
      %v2621 = vxor.u32 %v2618, 2147483648
      %v2622 = vmul.f32 %v2621, 1.442695
      %v2623 = vpow.pop %v2622
      %v2624 = vadd.f32 %v2623, 1.0
      %v2625 = vrcp.pop %v2624
      %v2626 = vmul.f32 1.0, %v2625
      %2628 = vrot.lane.b32.xlu0 %v2626, 2
      %v2629 = vpop.permute.xlu0 %2628
      %v2631 = vsel %vm476, %v431, %v2629
      %vm2632 = vcmask 23552
      %2633 = vst.msk [vmem:[%s430] sm:$0xff] %vm2632, %v2631
      %p2634 = scmp.lt.s32.totalorder %s25, 3
      %s2635 = scalar_select %p2634, %s25, 3
      %s2636 = smul.addr %s2635, 8
      %s2637 = scalar_lea.vmem %s12, %s2636
      // Predicated region
      $region69: #{tpu_custom_call.1} parent=67 // pred_check
        %p2638 = pneg %p305
      $region70: #{tpu_custom_call.1} parent=67 // pred_check_branch
        %2640 = sbr.rel (%p2638) target = $region72
      $region71: #{tpu_custom_call.1} parent=67 // pred_region
        _
      $region72: #{tpu_custom_call.1} parent=67 // pred_fallthru
        _
    $region68: #{tpu_custom_call.1} parent=5 // pred_fallthru
      _
    %p2641 = scmp.le.s32.totalorder 2, %s20
    // Predicated region
    $region73: #{tpu_custom_call.1} parent=5 // pred_check
      %p2642 = pneg %p2641
    $region74: #{tpu_custom_call.1} parent=5 // pred_check_branch
      %2644 = sbr.rel (%p2642) target = $region76
    $region75: #{tpu_custom_call.1} parent=5 // pred_region
      %s2645 = ssub.s32 %s20, 2
      // Predicated region
      $region77: #{tpu_custom_call.1} parent=75 // pred_check
        %p2646 = pneg %p311
      $region78: #{tpu_custom_call.1} parent=75 // pred_check_branch
        %2648 = sbr.rel (%p2646) target = $region80
      $region79: #{tpu_custom_call.1} parent=75 // pred_region
        %p2649 = scmp.lt.s32.totalorder %s26, 3
        %s2650 = scalar_select %p2649, %s26, 3
        %s2651 = smul.addr %s2650, 8
        %s2652 = scalar_lea.vmem %s12, %s2651
      $region80: #{tpu_custom_call.1} parent=75 // pred_fallthru
        _
    $region76: #{tpu_custom_call.1} parent=5 // pred_fallthru
      _
  $region6: #{tpu_custom_call.1} parent=0 // loop_footer
    %s24 = sadd.s32 1, %s20
  $region7: #{tpu_custom_call.1} parent=0 // loop_footer_branch
    %19 = sbr.rel target = $region3
  $region8: #{tpu_custom_call.1} parent=0 // loop_exit
    _

</llo_original>
